<compile_context>
chip_gen: v7x
topology: tpu7x:2x2x1
jax: 0.10.0
libtpu: 0.0.40
codegen_flags: <defaults>
</compile_context>

<pallas_src>
import math

import jax
import jax.numpy as jnp
from jax.experimental import pallas as pl
from jax.experimental.pallas import tpu as pltpu


def _round_up(a, b):
    return ((a + b - 1) // b) * b


def rgru_cell_kernel(x_ref, h_ref, wxr_ref, wxi_ref, wxn_ref,
                     whr_ref, whi_ref, whn_ref, o_ref):
    f32 = jnp.float32
    TN = o_ref.shape[1]
    col = pl.multiple_of(pl.program_id(1) * TN, 128)

    x = x_ref[...]                        # (BM, DP)  bf16 (matmul only)
    h_f32 = h_ref[...]                    # (BM, HP)  f32  (log path)
    h_bf = h_f32.astype(jnp.bfloat16)     # matmul copy

    # Gate matmuls on the MXU (bf16 inputs, f32 accumulation).  |bias| is
    # already folded into the wx gate blocks in the wrapper.
    i_r = jnp.dot(x, wxr_ref[...], preferred_element_type=f32)     # (BM, TN)
    i_i = jnp.dot(x, wxi_ref[...], preferred_element_type=f32)
    i_n = jnp.dot(x, wxn_ref[...], preferred_element_type=f32)
    h_r = jnp.dot(h_bf, whr_ref[...], preferred_element_type=f32)
    h_i = jnp.dot(h_bf, whi_ref[...], preferred_element_type=f32)
    h_n = jnp.dot(h_bf, whn_ref[...], preferred_element_type=f32)

    # Column chunk of hidden produced by this grid step (f32 for log()).
    h_col = h_ref[:, pl.ds(col, TN)]                                # (BM, TN)

    # diag=True branch of RGRUCell.forward; exp(log a + log b) == a*b for the
    # positive activations this model assumes.
    # sigmoid(z) = 0.5 + 0.5*tanh(0.5*z): single EUP op per gate.
    resetgate = 0.5 + 0.5 * jnp.tanh(0.5 * (i_r * h_r))
    inputgate = 0.5 + 0.5 * jnp.tanh(0.5 * (i_i * h_i))
    z = i_n * (resetgate * h_n)
    # Softplus matching torch.nn.Softplus(beta=1, threshold=20).
    newgate = jnp.where(z > 20.0, z, jnp.log1p(jnp.exp(jnp.minimum(z, 20.0))))
    # Geometric interpolation genuinely needs log/exp.
    hy = jnp.exp((1.0 - inputgate) * jnp.log(newgate)
                 + inputgate * jnp.log(h_col))
    o_ref[...] = hy.astype(o_ref.dtype)


def rgru_cell_forward(x, hidden, wx, wh, bias, *, block_b=256, block_n=512):
    """Pallas RGRUCell (diag=True) forward.

    x:(B,D), hidden:(B,H) (positive), wx:(D,3H), wh:(H,3H), bias:(3H,) -> (B,H)
    """
    B, D = x.shape
    H = hidden.shape[1]
    assert wx.shape == (D, 3 * H)
    assert wh.shape == (H, 3 * H)
    assert bias.shape == (3 * H,)

    f32, bf16 = jnp.float32, jnp.bfloat16

    HP = _round_up(H, 128)                 # lane-align each gate column block
    DP = _round_up(D, 128)                 # lane-align / MXU-align x's K dim
    BM = min(_round_up(B, 8), block_b)     # batch tile (sublane-aligned)
    BP = _round_up(B, BM)
    # Gate-column tile: multiple of 128 that divides HP, capped by block_n.
    TN = 128
    for cand in (block_n, 512, 384, 256, 128):
        if 0 < cand <= HP and cand % 128 == 0 and HP % cand == 0:
            TN = cand
            break
    n_col = HP // TN
    n_bat = BP // BM

    # ---- parameter prep (hoisted |.|, bias fold, bf16, per-gate layout) ------
    b_abs = jnp.abs(bias).astype(f32).reshape(3, H)
    wx_abs = jnp.abs(wx).astype(f32)
    wh_abs = jnp.abs(wh).astype(f32)

    def prep_wx(g):
        # Fold |b_g| into gate g's columns of |Wx| (exact: multiplicative bias).
        w = wx_abs[:, g * H:(g + 1) * H] * b_abs[g][None, :]
        return jnp.pad(w, ((0, DP - D), (0, HP - H))).astype(bf16)

    def prep_wh(g):
        w = wh_abs[:, g * H:(g + 1) * H]
        return jnp.pad(w, ((0, HP - H), (0, HP - H))).astype(bf16)

    wxr, wxi, wxn = prep_wx(0), prep_wx(1), prep_wx(2)
    whr, whi, whn = prep_wh(0), prep_wh(1), prep_wh(2)

    # Padded activations.  x pads with 0 (exact for the matmul; x is only the
    # bf16 matmul copy).  Hidden pads with 1.0 so log(h) stays finite in padded
    # rows/lanes; its padded K-rows multiply zero |Wh| rows, so real columns
    # are unaffected.
    x_p = jnp.pad(x.astype(bf16), ((0, BP - B), (0, DP - D)))
    h_p = jnp.pad(hidden.astype(f32), ((0, BP - B), (0, HP - H)),
                  constant_values=1.0)

    # ---- VMEM budget (weights + pipelined IO tiles + gate temporaries) -------
    w_buf = 1 if n_col == 1 else 2
    est = (3 * (DP * TN + HP * TN) * 2 * w_buf        # bf16 weight buffers
           + BM * DP * 2 * 2                           # x tiles (bf16, 2-buf)
           + BM * HP * 4 * 2                           # hidden tiles (f32, 2-buf)
           + BM * TN * 4 * 2                           # output tiles (f32, 2-buf)
           + BM * TN * 4 * 12)                         # gate/f32 temporaries
    vmem_limit = int(min(max(2 * est + (8 << 20), 32 << 20), 56 << 20))

    def build(single_buffer_weights):
        w_kw = {}
        if single_buffer_weights:
            # Grid-invariant operands: no point double-buffering them.
            w_kw = dict(pipeline_mode=pl.Buffered(1))
        wx_spec = pl.BlockSpec((DP, TN), lambda i, j: (0, j), **w_kw)
        wh_spec = pl.BlockSpec((HP, TN), lambda i, j: (0, j), **w_kw)
        return pl.pallas_call(
            rgru_cell_kernel,
            out_shape=jax.ShapeDtypeStruct((BP, HP), f32),
            grid_spec=pltpu.PrefetchScalarGridSpec(
                num_scalar_prefetch=0,
                grid=(n_bat, n_col),
                in_specs=[
                    pl.BlockSpec((BM, DP), lambda i, j: (i, 0)),   # x tile (bf16)
                    pl.BlockSpec((BM, HP), lambda i, j: (i, 0)),   # hidden (f32)
                    wx_spec, wx_spec, wx_spec,                     # |Wx|*|b| r/i/n
                    wh_spec, wh_spec, wh_spec,                     # |Wh| r/i/n
                ],
                out_specs=pl.BlockSpec((BM, TN), lambda i, j: (i, j)),
            ),
            compiler_params=pltpu.CompilerParams(
                dimension_semantics=("parallel", "parallel"),
                vmem_limit_bytes=vmem_limit,
            ),
        )

    args = (x_p, h_p, wxr, wxi, wxn, whr, whi, whn)
    try:
        out = build(single_buffer_weights=(n_col == 1))(*args)
    except Exception:
        # Conservative fallback in case single-buffered pipeline_mode is
        # rejected by the installed Pallas version.
        out = build(single_buffer_weights=False)(*args)

    return out[:B, :H]


def _reference(x, hidden, wx, wh, bias):
    """Pure-JAX f32 reference mirroring the PyTorch code (diag=True) exactly."""
    H = hidden.shape[1]
    gx = x @ jnp.abs(wx)
    gh = hidden @ jnp.abs(wh)
    i_r, i_i, i_n = gx[:, :H], gx[:, H:2 * H], gx[:, 2 * H:]
    h_r, h_i, h_n = gh[:, :H], gh[:, H:2 * H], gh[:, 2 * H:]
    b = jnp.abs(bias)
    b_r, b_i, b_n = b[:H], b[H:2 * H], b[2 * H:]
    sp = lambda v: jnp.where(v > 20.0, v, jnp.log1p(jnp.exp(jnp.minimum(v, 20.0))))
    resetgate = jax.nn.sigmoid(b_r * jnp.exp(jnp.log(i_r) + jnp.log(h_r)))
    inputgate = jax.nn.sigmoid(b_i * jnp.exp(jnp.log(i_i) + jnp.log(h_i)))
    newgate = sp(b_n * jnp.exp(jnp.log(i_n) + jnp.log(resetgate * h_n)))
    return jnp.exp(jnp.log(newgate) * (1 - inputgate) + inputgate * jnp.log(hidden))


if __name__ == "__main__":
    B, D, H = 8, 16, 32
    key = jax.random.PRNGKey(0)
    k_wx, k_wh, k_b, k_x, k_h = jax.random.split(key, 5)

    # reset_parameters(): uniform(-std, std), std = 1/sqrt(hidden_size)
    std = 1.0 / math.sqrt(H)
    wx = jax.random.uniform(k_wx, (D, 3 * H), jnp.float32, -std, std)
    wh = jax.random.uniform(k_wh, (H, 3 * H), jnp.float32, -std, std)
    bias = jax.random.uniform(k_b, (3 * H,), jnp.float32, -std, std)

    # The diag path takes log() of gates and hidden -> use positive inputs.
    x = jax.random.uniform(k_x, (B, D), jnp.float32, 0.1, 1.0)
    hidden = jax.random.uniform(k_h, (B, H), jnp.float32, 0.1, 1.0)

    out = rgru_cell_forward(x, hidden, wx, wh, bias)
    out = jax.block_until_ready(out)

    ref = _reference(x, hidden, wx, wh, bias)
    assert out.shape == (B, H)
    # bf16 MXU matmuls (f32 accumulation) vs f32 reference -> loosened tolerance.
    assert jnp.allclose(out, ref, atol=3e-2, rtol=3e-2), "mismatch vs reference"

    # TODO(synk): diag=False (nn.Linear + Tanh) branch not implemented; only the
    # default diag=True path is covered.
    # TODO(synk): multi-timestep sequence fusion (weights resident across T steps,
    # hidden carried in VMEM) not applicable here since the module's forward is a
    # single cell step.
    print("KERNEL_OK")
</pallas_src>

<mosaic_0001>
module attributes {stable_mosaic.version = 11 : i64} {
  func.func @rgru_cell_kernel(%arg0: i32, %arg1: i32, %arg2: memref<8x128xbf16, #tpu.memory_space<vmem>>, %arg3: memref<8x128xf32, #tpu.memory_space<vmem>>, %arg4: memref<128x128xbf16, #tpu.memory_space<vmem>>, %arg5: memref<128x128xbf16, #tpu.memory_space<vmem>>, %arg6: memref<128x128xbf16, #tpu.memory_space<vmem>>, %arg7: memref<128x128xbf16, #tpu.memory_space<vmem>>, %arg8: memref<128x128xbf16, #tpu.memory_space<vmem>>, %arg9: memref<128x128xbf16, #tpu.memory_space<vmem>>, %arg10: memref<8x128xf32, #tpu.memory_space<vmem>>) attributes {dimension_semantics = [#tpu.dimension_semantics<parallel>, #tpu.dimension_semantics<parallel>], iteration_bounds = array<i64: 1, 1>, scalar_prefetch = 0 : i64, scratch_operands = 0 : i64, tpu.core_type = #tpu.core_type<tc>, window_params = [{transform_indices = @transform_0, window_bounds = array<i64: 8, 128>}, {transform_indices = @transform_1, window_bounds = array<i64: 8, 128>}, {pipeline_mode = #tpu.pipeline_mode<synchronous>, transform_indices = @transform_2, window_bounds = array<i64: 128, 128>}, {pipeline_mode = #tpu.pipeline_mode<synchronous>, transform_indices = @transform_3, window_bounds = array<i64: 128, 128>}, {pipeline_mode = #tpu.pipeline_mode<synchronous>, transform_indices = @transform_4, window_bounds = array<i64: 128, 128>}, {pipeline_mode = #tpu.pipeline_mode<synchronous>, transform_indices = @transform_5, window_bounds = array<i64: 128, 128>}, {pipeline_mode = #tpu.pipeline_mode<synchronous>, transform_indices = @transform_6, window_bounds = array<i64: 128, 128>}, {pipeline_mode = #tpu.pipeline_mode<synchronous>, transform_indices = @transform_7, window_bounds = array<i64: 128, 128>}, {transform_indices = @transform_8, window_bounds = array<i64: 8, 128>}]} {
    %c128_i32 = arith.constant 128 : i32
    %0 = arith.muli %arg1, %c128_i32 : i32
    %1 = tpu.assume_multiple %0, 128 : i32
    %c0 = arith.constant 0 : index
    %c0_0 = arith.constant 0 : index
    %2 = vector.load %arg2[%c0, %c0_0] : memref<8x128xbf16, #tpu.memory_space<vmem>>, vector<8x128xbf16>
    %c0_1 = arith.constant 0 : index
    %c0_2 = arith.constant 0 : index
    %3 = vector.load %arg3[%c0_1, %c0_2] : memref<8x128xf32, #tpu.memory_space<vmem>>, vector<8x128xf32>
    %4 = arith.truncf %3 : vector<8x128xf32> to vector<8x128xbf16>
    %c0_3 = arith.constant 0 : index
    %c0_4 = arith.constant 0 : index
    %5 = vector.load %arg4[%c0_3, %c0_4] : memref<128x128xbf16, #tpu.memory_space<vmem>>, vector<128x128xbf16>
    %cst = arith.constant dense<0.000000e+00> : vector<8x128xf32>
    %6 = tpu.matmul %2, %5, %cst {dimension_numbers = #tpu.dot_dimension_numbers<[1], [0], [0], [1], [0, 0, 1, 1], [], []>} : vector<8x128xbf16>, vector<128x128xbf16>, vector<8x128xf32> -> vector<8x128xf32>
    %c0_5 = arith.constant 0 : index
    %c0_6 = arith.constant 0 : index
    %7 = vector.load %arg5[%c0_5, %c0_6] : memref<128x128xbf16, #tpu.memory_space<vmem>>, vector<128x128xbf16>
    %cst_7 = arith.constant dense<0.000000e+00> : vector<8x128xf32>
    %8 = tpu.matmul %2, %7, %cst_7 {dimension_numbers = #tpu.dot_dimension_numbers<[1], [0], [0], [1], [0, 0, 1, 1], [], []>} : vector<8x128xbf16>, vector<128x128xbf16>, vector<8x128xf32> -> vector<8x128xf32>
    %c0_8 = arith.constant 0 : index
    %c0_9 = arith.constant 0 : index
    %9 = vector.load %arg6[%c0_8, %c0_9] : memref<128x128xbf16, #tpu.memory_space<vmem>>, vector<128x128xbf16>
    %cst_10 = arith.constant dense<0.000000e+00> : vector<8x128xf32>
    %10 = tpu.matmul %2, %9, %cst_10 {dimension_numbers = #tpu.dot_dimension_numbers<[1], [0], [0], [1], [0, 0, 1, 1], [], []>} : vector<8x128xbf16>, vector<128x128xbf16>, vector<8x128xf32> -> vector<8x128xf32>
    %c0_11 = arith.constant 0 : index
    %c0_12 = arith.constant 0 : index
    %11 = vector.load %arg7[%c0_11, %c0_12] : memref<128x128xbf16, #tpu.memory_space<vmem>>, vector<128x128xbf16>
    %cst_13 = arith.constant dense<0.000000e+00> : vector<8x128xf32>
    %12 = tpu.matmul %4, %11, %cst_13 {dimension_numbers = #tpu.dot_dimension_numbers<[1], [0], [0], [1], [0, 0, 1, 1], [], []>} : vector<8x128xbf16>, vector<128x128xbf16>, vector<8x128xf32> -> vector<8x128xf32>
    %c0_14 = arith.constant 0 : index
    %c0_15 = arith.constant 0 : index
    %13 = vector.load %arg8[%c0_14, %c0_15] : memref<128x128xbf16, #tpu.memory_space<vmem>>, vector<128x128xbf16>
    %cst_16 = arith.constant dense<0.000000e+00> : vector<8x128xf32>
    %14 = tpu.matmul %4, %13, %cst_16 {dimension_numbers = #tpu.dot_dimension_numbers<[1], [0], [0], [1], [0, 0, 1, 1], [], []>} : vector<8x128xbf16>, vector<128x128xbf16>, vector<8x128xf32> -> vector<8x128xf32>
    %c0_17 = arith.constant 0 : index
    %c0_18 = arith.constant 0 : index
    %15 = vector.load %arg9[%c0_17, %c0_18] : memref<128x128xbf16, #tpu.memory_space<vmem>>, vector<128x128xbf16>
    %cst_19 = arith.constant dense<0.000000e+00> : vector<8x128xf32>
    %16 = tpu.matmul %4, %15, %cst_19 {dimension_numbers = #tpu.dot_dimension_numbers<[1], [0], [0], [1], [0, 0, 1, 1], [], []>} : vector<8x128xbf16>, vector<128x128xbf16>, vector<8x128xf32> -> vector<8x128xf32>
    %c0_20 = arith.constant 0 : index
    %17 = arith.index_cast %1 : i32 to index
    %18 = vector.load %arg3[%c0_20, %17] : memref<8x128xf32, #tpu.memory_space<vmem>>, vector<8x128xf32>
    %19 = arith.mulf %6, %12 : vector<8x128xf32>
    %cst_21 = arith.constant 5.000000e-01 : f32
    %20 = vector.broadcast %cst_21 : f32 to vector<8x128xf32>
    %21 = arith.mulf %20, %19 : vector<8x128xf32>
    %22 = math.tanh %21 : vector<8x128xf32>
    %cst_22 = arith.constant 5.000000e-01 : f32
    %23 = vector.broadcast %cst_22 : f32 to vector<8x128xf32>
    %24 = arith.mulf %23, %22 : vector<8x128xf32>
    %cst_23 = arith.constant 5.000000e-01 : f32
    %25 = vector.broadcast %cst_23 : f32 to vector<8x128xf32>
    %26 = arith.addf %25, %24 : vector<8x128xf32>
    %27 = arith.mulf %8, %14 : vector<8x128xf32>
    %cst_24 = arith.constant 5.000000e-01 : f32
    %28 = vector.broadcast %cst_24 : f32 to vector<8x128xf32>
    %29 = arith.mulf %28, %27 : vector<8x128xf32>
    %30 = math.tanh %29 : vector<8x128xf32>
    %cst_25 = arith.constant 5.000000e-01 : f32
    %31 = vector.broadcast %cst_25 : f32 to vector<8x128xf32>
    %32 = arith.mulf %31, %30 : vector<8x128xf32>
    %cst_26 = arith.constant 5.000000e-01 : f32
    %33 = vector.broadcast %cst_26 : f32 to vector<8x128xf32>
    %34 = arith.addf %33, %32 : vector<8x128xf32>
    %35 = arith.mulf %26, %16 : vector<8x128xf32>
    %36 = arith.mulf %10, %35 : vector<8x128xf32>
    %cst_27 = arith.constant 2.000000e+01 : f32
    %37 = vector.broadcast %cst_27 : f32 to vector<8x128xf32>
    %38 = arith.cmpf ogt, %36, %37 : vector<8x128xf32>
    %cst_28 = arith.constant 2.000000e+01 : f32
    %39 = vector.broadcast %cst_28 : f32 to vector<8x128xf32>
    %40 = arith.minimumf %36, %39 : vector<8x128xf32>
    %41 = math.exp %40 : vector<8x128xf32>
    %42 = math.log1p %41 : vector<8x128xf32>
    %43 = arith.select %38, %36, %42 : vector<8x128xi1>, vector<8x128xf32>
    %cst_29 = arith.constant 1.000000e+00 : f32
    %44 = vector.broadcast %cst_29 : f32 to vector<8x128xf32>
    %45 = arith.subf %44, %34 : vector<8x128xf32>
    %46 = math.log %43 : vector<8x128xf32>
    %47 = arith.mulf %45, %46 : vector<8x128xf32>
    %48 = math.log %18 : vector<8x128xf32>
    %49 = arith.mulf %34, %48 : vector<8x128xf32>
    %50 = arith.addf %47, %49 : vector<8x128xf32>
    %51 = math.exp %50 : vector<8x128xf32>
    %c0_30 = arith.constant 0 : index
    %c0_31 = arith.constant 0 : index
    %52 = vector.load %arg10[%c0_30, %c0_31] : memref<8x128xf32, #tpu.memory_space<vmem>>, vector<8x128xf32>
    tpu.vector_store %arg10[%c0_30, %c0_31], %51 {strides = array<i32>} : memref<8x128xf32, #tpu.memory_space<vmem>>, vector<8x128xf32>,
    return
  }
  func.func @transform_0(%arg0: i32, %arg1: i32) -> (i32, i32) {
    %c0_i32 = arith.constant 0 : i32
    %c0_i32_0 = arith.constant 0 : i32
    return %arg0, %c0_i32 : i32, i32
  }
  func.func @transform_1(%arg0: i32, %arg1: i32) -> (i32, i32) {
    %c0_i32 = arith.constant 0 : i32
    %c0_i32_0 = arith.constant 0 : i32
    return %arg0, %c0_i32 : i32, i32
  }
  func.func @transform_2(%arg0: i32, %arg1: i32) -> (i32, i32) {
    %c0_i32 = arith.constant 0 : i32
    %c0_i32_0 = arith.constant 0 : i32
    return %c0_i32, %arg1 : i32, i32
  }
  func.func @transform_3(%arg0: i32, %arg1: i32) -> (i32, i32) {
    %c0_i32 = arith.constant 0 : i32
    %c0_i32_0 = arith.constant 0 : i32
    return %c0_i32, %arg1 : i32, i32
  }
  func.func @transform_4(%arg0: i32, %arg1: i32) -> (i32, i32) {
    %c0_i32 = arith.constant 0 : i32
    %c0_i32_0 = arith.constant 0 : i32
    return %c0_i32, %arg1 : i32, i32
  }
  func.func @transform_5(%arg0: i32, %arg1: i32) -> (i32, i32) {
    %c0_i32 = arith.constant 0 : i32
    %c0_i32_0 = arith.constant 0 : i32
    return %c0_i32, %arg1 : i32, i32
  }
  func.func @transform_6(%arg0: i32, %arg1: i32) -> (i32, i32) {
    %c0_i32 = arith.constant 0 : i32
    %c0_i32_0 = arith.constant 0 : i32
    return %c0_i32, %arg1 : i32, i32
  }
  func.func @transform_7(%arg0: i32, %arg1: i32) -> (i32, i32) {
    %c0_i32 = arith.constant 0 : i32
    %c0_i32_0 = arith.constant 0 : i32
    return %c0_i32, %arg1 : i32, i32
  }
  func.func @transform_8(%arg0: i32, %arg1: i32) -> (i32, i32) {
    %c0_i32 = arith.constant 0 : i32
    return %arg0, %arg1 : i32, i32
  }
}

module attributes {stable_mosaic.version = 11 : i64} {
  func.func @rgru_cell_kernel(%arg0: i32, %arg1: i32, %arg2: memref<8x128xbf16, #tpu.memory_space<vmem>>, %arg3: memref<8x128xf32, #tpu.memory_space<vmem>>, %arg4: memref<128x128xbf16, #tpu.memory_space<vmem>>, %arg5: memref<128x128xbf16, #tpu.memory_space<vmem>>, %arg6: memref<128x128xbf16, #tpu.memory_space<vmem>>, %arg7: memref<128x128xbf16, #tpu.memory_space<vmem>>, %arg8: memref<128x128xbf16, #tpu.memory_space<vmem>>, %arg9: memref<128x128xbf16, #tpu.memory_space<vmem>>, %arg10: memref<8x128xf32, #tpu.memory_space<vmem>>) attributes {dimension_semantics = [#tpu.dimension_semantics<parallel>, #tpu.dimension_semantics<parallel>], iteration_bounds = array<i64: 1, 1>, scalar_prefetch = 0 : i64, scratch_operands = 0 : i64, tpu.core_type = #tpu.core_type<tc>, window_params = [{transform_indices = @transform_0, window_bounds = array<i64: 8, 128>}, {transform_indices = @transform_1, window_bounds = array<i64: 8, 128>}, {transform_indices = @transform_2, window_bounds = array<i64: 128, 128>}, {transform_indices = @transform_3, window_bounds = array<i64: 128, 128>}, {transform_indices = @transform_4, window_bounds = array<i64: 128, 128>}, {transform_indices = @transform_5, window_bounds = array<i64: 128, 128>}, {transform_indices = @transform_6, window_bounds = array<i64: 128, 128>}, {transform_indices = @transform_7, window_bounds = array<i64: 128, 128>}, {transform_indices = @transform_8, window_bounds = array<i64: 8, 128>}]} {
    %c128_i32 = arith.constant 128 : i32
    %0 = arith.muli %arg1, %c128_i32 : i32
    %1 = tpu.assume_multiple %0, 128 : i32
    %c0 = arith.constant 0 : index
    %c0_0 = arith.constant 0 : index
    %2 = vector.load %arg2[%c0, %c0_0] : memref<8x128xbf16, #tpu.memory_space<vmem>>, vector<8x128xbf16>
    %c0_1 = arith.constant 0 : index
    %c0_2 = arith.constant 0 : index
    %3 = vector.load %arg3[%c0_1, %c0_2] : memref<8x128xf32, #tpu.memory_space<vmem>>, vector<8x128xf32>
    %4 = arith.truncf %3 : vector<8x128xf32> to vector<8x128xbf16>
    %c0_3 = arith.constant 0 : index
    %c0_4 = arith.constant 0 : index
    %5 = vector.load %arg4[%c0_3, %c0_4] : memref<128x128xbf16, #tpu.memory_space<vmem>>, vector<128x128xbf16>
    %cst = arith.constant dense<0.000000e+00> : vector<8x128xf32>
    %6 = tpu.matmul %2, %5, %cst {dimension_numbers = #tpu.dot_dimension_numbers<[1], [0], [0], [1], [0, 0, 1, 1], [], []>} : vector<8x128xbf16>, vector<128x128xbf16>, vector<8x128xf32> -> vector<8x128xf32>
    %c0_5 = arith.constant 0 : index
    %c0_6 = arith.constant 0 : index
    %7 = vector.load %arg5[%c0_5, %c0_6] : memref<128x128xbf16, #tpu.memory_space<vmem>>, vector<128x128xbf16>
    %cst_7 = arith.constant dense<0.000000e+00> : vector<8x128xf32>
    %8 = tpu.matmul %2, %7, %cst_7 {dimension_numbers = #tpu.dot_dimension_numbers<[1], [0], [0], [1], [0, 0, 1, 1], [], []>} : vector<8x128xbf16>, vector<128x128xbf16>, vector<8x128xf32> -> vector<8x128xf32>
    %c0_8 = arith.constant 0 : index
    %c0_9 = arith.constant 0 : index
    %9 = vector.load %arg6[%c0_8, %c0_9] : memref<128x128xbf16, #tpu.memory_space<vmem>>, vector<128x128xbf16>
    %cst_10 = arith.constant dense<0.000000e+00> : vector<8x128xf32>
    %10 = tpu.matmul %2, %9, %cst_10 {dimension_numbers = #tpu.dot_dimension_numbers<[1], [0], [0], [1], [0, 0, 1, 1], [], []>} : vector<8x128xbf16>, vector<128x128xbf16>, vector<8x128xf32> -> vector<8x128xf32>
    %c0_11 = arith.constant 0 : index
    %c0_12 = arith.constant 0 : index
    %11 = vector.load %arg7[%c0_11, %c0_12] : memref<128x128xbf16, #tpu.memory_space<vmem>>, vector<128x128xbf16>
    %cst_13 = arith.constant dense<0.000000e+00> : vector<8x128xf32>
    %12 = tpu.matmul %4, %11, %cst_13 {dimension_numbers = #tpu.dot_dimension_numbers<[1], [0], [0], [1], [0, 0, 1, 1], [], []>} : vector<8x128xbf16>, vector<128x128xbf16>, vector<8x128xf32> -> vector<8x128xf32>
    %c0_14 = arith.constant 0 : index
    %c0_15 = arith.constant 0 : index
    %13 = vector.load %arg8[%c0_14, %c0_15] : memref<128x128xbf16, #tpu.memory_space<vmem>>, vector<128x128xbf16>
    %cst_16 = arith.constant dense<0.000000e+00> : vector<8x128xf32>
    %14 = tpu.matmul %4, %13, %cst_16 {dimension_numbers = #tpu.dot_dimension_numbers<[1], [0], [0], [1], [0, 0, 1, 1], [], []>} : vector<8x128xbf16>, vector<128x128xbf16>, vector<8x128xf32> -> vector<8x128xf32>
    %c0_17 = arith.constant 0 : index
    %c0_18 = arith.constant 0 : index
    %15 = vector.load %arg9[%c0_17, %c0_18] : memref<128x128xbf16, #tpu.memory_space<vmem>>, vector<128x128xbf16>
    %cst_19 = arith.constant dense<0.000000e+00> : vector<8x128xf32>
    %16 = tpu.matmul %4, %15, %cst_19 {dimension_numbers = #tpu.dot_dimension_numbers<[1], [0], [0], [1], [0, 0, 1, 1], [], []>} : vector<8x128xbf16>, vector<128x128xbf16>, vector<8x128xf32> -> vector<8x128xf32>
    %c0_20 = arith.constant 0 : index
    %17 = arith.index_cast %1 : i32 to index
    %18 = vector.load %arg3[%c0_20, %17] : memref<8x128xf32, #tpu.memory_space<vmem>>, vector<8x128xf32>
    %19 = arith.mulf %6, %12 : vector<8x128xf32>
    %cst_21 = arith.constant 5.000000e-01 : f32
    %20 = vector.broadcast %cst_21 : f32 to vector<8x128xf32>
    %21 = arith.mulf %20, %19 : vector<8x128xf32>
    %22 = math.tanh %21 : vector<8x128xf32>
    %cst_22 = arith.constant 5.000000e-01 : f32
    %23 = vector.broadcast %cst_22 : f32 to vector<8x128xf32>
    %24 = arith.mulf %23, %22 : vector<8x128xf32>
    %cst_23 = arith.constant 5.000000e-01 : f32
    %25 = vector.broadcast %cst_23 : f32 to vector<8x128xf32>
    %26 = arith.addf %25, %24 : vector<8x128xf32>
    %27 = arith.mulf %8, %14 : vector<8x128xf32>
    %cst_24 = arith.constant 5.000000e-01 : f32
    %28 = vector.broadcast %cst_24 : f32 to vector<8x128xf32>
    %29 = arith.mulf %28, %27 : vector<8x128xf32>
    %30 = math.tanh %29 : vector<8x128xf32>
    %cst_25 = arith.constant 5.000000e-01 : f32
    %31 = vector.broadcast %cst_25 : f32 to vector<8x128xf32>
    %32 = arith.mulf %31, %30 : vector<8x128xf32>
    %cst_26 = arith.constant 5.000000e-01 : f32
    %33 = vector.broadcast %cst_26 : f32 to vector<8x128xf32>
    %34 = arith.addf %33, %32 : vector<8x128xf32>
    %35 = arith.mulf %26, %16 : vector<8x128xf32>
    %36 = arith.mulf %10, %35 : vector<8x128xf32>
    %cst_27 = arith.constant 2.000000e+01 : f32
    %37 = vector.broadcast %cst_27 : f32 to vector<8x128xf32>
    %38 = arith.cmpf ogt, %36, %37 : vector<8x128xf32>
    %cst_28 = arith.constant 2.000000e+01 : f32
    %39 = vector.broadcast %cst_28 : f32 to vector<8x128xf32>
    %40 = arith.minimumf %36, %39 : vector<8x128xf32>
    %41 = math.exp %40 : vector<8x128xf32>
    %42 = math.log1p %41 : vector<8x128xf32>
    %43 = arith.select %38, %36, %42 : vector<8x128xi1>, vector<8x128xf32>
    %cst_29 = arith.constant 1.000000e+00 : f32
    %44 = vector.broadcast %cst_29 : f32 to vector<8x128xf32>
    %45 = arith.subf %44, %34 : vector<8x128xf32>
    %46 = math.log %43 : vector<8x128xf32>
    %47 = arith.mulf %45, %46 : vector<8x128xf32>
    %48 = math.log %18 : vector<8x128xf32>
    %49 = arith.mulf %34, %48 : vector<8x128xf32>
    %50 = arith.addf %47, %49 : vector<8x128xf32>
    %51 = math.exp %50 : vector<8x128xf32>
    %c0_30 = arith.constant 0 : index
    %c0_31 = arith.constant 0 : index
    %52 = vector.load %arg10[%c0_30, %c0_31] : memref<8x128xf32, #tpu.memory_space<vmem>>, vector<8x128xf32>
    tpu.vector_store %arg10[%c0_30, %c0_31], %51 {strides = array<i32>} : memref<8x128xf32, #tpu.memory_space<vmem>>, vector<8x128xf32>,
    return
  }
  func.func @transform_0(%arg0: i32, %arg1: i32) -> (i32, i32) {
    %c0_i32 = arith.constant 0 : i32
    %c0_i32_0 = arith.constant 0 : i32
    return %arg0, %c0_i32 : i32, i32
  }
  func.func @transform_1(%arg0: i32, %arg1: i32) -> (i32, i32) {
    %c0_i32 = arith.constant 0 : i32
    %c0_i32_0 = arith.constant 0 : i32
    return %arg0, %c0_i32 : i32, i32
  }
  func.func @transform_2(%arg0: i32, %arg1: i32) -> (i32, i32) {
    %c0_i32 = arith.constant 0 : i32
    %c0_i32_0 = arith.constant 0 : i32
    return %c0_i32, %arg1 : i32, i32
  }
  func.func @transform_3(%arg0: i32, %arg1: i32) -> (i32, i32) {
    %c0_i32 = arith.constant 0 : i32
    %c0_i32_0 = arith.constant 0 : i32
    return %c0_i32, %arg1 : i32, i32
  }
  func.func @transform_4(%arg0: i32, %arg1: i32) -> (i32, i32) {
    %c0_i32 = arith.constant 0 : i32
    %c0_i32_0 = arith.constant 0 : i32
    return %c0_i32, %arg1 : i32, i32
  }
  func.func @transform_5(%arg0: i32, %arg1: i32) -> (i32, i32) {
    %c0_i32 = arith.constant 0 : i32
    %c0_i32_0 = arith.constant 0 : i32
    return %c0_i32, %arg1 : i32, i32
  }
  func.func @transform_6(%arg0: i32, %arg1: i32) -> (i32, i32) {
    %c0_i32 = arith.constant 0 : i32
    %c0_i32_0 = arith.constant 0 : i32
    return %c0_i32, %arg1 : i32, i32
  }
  func.func @transform_7(%arg0: i32, %arg1: i32) -> (i32, i32) {
    %c0_i32 = arith.constant 0 : i32
    %c0_i32_0 = arith.constant 0 : i32
    return %c0_i32, %arg1 : i32, i32
  }
  func.func @transform_8(%arg0: i32, %arg1: i32) -> (i32, i32) {
    %c0_i32 = arith.constant 0 : i32
    return %arg0, %arg1 : i32, i32
  }
}

</mosaic_0001>

<llo_original>
// kernel: tpu_custom_call.1
$region0: #{tpu_custom_call.1}
  #allocation0 [shape = 'u32[]', space=smem, size = 0x4, offset = 0x4, fixed_abs, tag = 'smem constant byte address 0x4 - core index']
  #allocation1 [shape = 'u32[144,128]{1,0:T(1,128)}', space=vmem, size = 0x12000, scoped, tag = 'internal scratch']
  %s0 = inlined_call_operand.hbm [shape: bf16[8,128], index: 0, kind: input, shape index: {}]
  %s1 = inlined_call_operand.hbm [shape: f32[8,128], index: 1, kind: input, shape index: {}]
  %s2 = inlined_call_operand.hbm [shape: bf16[128,128], index: 2, kind: input, shape index: {}]
  %s3 = inlined_call_operand.hbm [shape: bf16[128,128], index: 3, kind: input, shape index: {}]
  %s4 = inlined_call_operand.hbm [shape: bf16[128,128], index: 4, kind: input, shape index: {}]
  %s5 = inlined_call_operand.hbm [shape: bf16[128,128], index: 5, kind: input, shape index: {}]
  %s6 = inlined_call_operand.hbm [shape: bf16[128,128], index: 6, kind: input, shape index: {}]
  %s7 = inlined_call_operand.hbm [shape: bf16[128,128], index: 7, kind: input, shape index: {}]
  %s8 = inlined_call_operand.hbm [shape: f32[8,128], index: 8, kind: output, shape index: {}]
  %s9 = sld [smem:[#allocation0]]
  $region74: #{tpu_custom_call.1} parent=0
    _
  %s11 = ssub.s32 1, %s9
  %s12 = scalar_select 0, %s11, %s9
  $region1: #{tpu_custom_call.1} parent=0
    #allocation2 [shape = 'u8[2048]{0}', space=vmem, size = 0x800, scoped, tag = 'input window, operand 0, single buffered']
    #allocation3 [shape = 's32[1]{0}', space=sflag, size = 0x4, scoped, tag = 'scoped memory for tpu_custom_call.1']
    #allocation4 [shape = 's32[1]{0}', space=sflag, size = 0x4, scoped, tag = 'scoped memory for tpu_custom_call.1']
    #allocation5 [shape = 'u8[4096]{0}', space=vmem, size = 0x1000, scoped, tag = 'input window, operand 1, single buffered']
    #allocation6 [shape = 's32[1]{0}', space=sflag, size = 0x4, scoped, tag = 'scoped memory for tpu_custom_call.1']
    #allocation7 [shape = 'u8[32768]{0}', space=vmem, size = 0x8000, scoped, tag = 'input window, operand 2, single buffered']
    #allocation8 [shape = 'u8[32768]{0}', space=vmem, size = 0x8000, scoped, tag = 'input window, operand 3, single buffered']
    #allocation9 [shape = 's32[1]{0}', space=sflag, size = 0x4, scoped, tag = 'scoped memory for tpu_custom_call.1']
    #allocation10 [shape = 'u8[32768]{0}', space=vmem, size = 0x8000, scoped, tag = 'input window, operand 4, single buffered']
    #allocation11 [shape = 'u8[32768]{0}', space=vmem, size = 0x8000, scoped, tag = 'input window, operand 5, single buffered']
    #allocation12 [shape = 's32[1]{0}', space=sflag, size = 0x4, scoped, tag = 'scoped memory for tpu_custom_call.1']
    #allocation13 [shape = 'u8[32768]{0}', space=vmem, size = 0x8000, scoped, tag = 'input window, operand 6, single buffered']
    #allocation14 [shape = 'u8[32768]{0}', space=vmem, size = 0x8000, scoped, tag = 'input window, operand 7, single buffered']
    #allocation15 [shape = 's32[1]{0}', space=sflag, size = 0x4, scoped, tag = 'scoped memory for tpu_custom_call.1']
    #allocation16 [shape = 'u8[4096]{0}', space=vmem, size = 0x1000, scoped, tag = 'output window, operand 0, single buffered']
    %13 = vsyncpa [#allocation3], 0
    %14 = vsyncpa [#allocation6], 0
    %15 = vsyncpa [#allocation9], 0
    %16 = vsyncpa [#allocation12], 0
    %17 = vsyncpa [#allocation15], 0
    %18 = vsyncpa [#allocation4], 0
    // Predicated region
    $region2: #{tpu_custom_call.1} parent=1 // pred_check
      _
    $region3: #{tpu_custom_call.1} parent=1 // pred_check_branch
      %20 = sbr.rel (0) target = $region5
    $region4: #{tpu_custom_call.1} parent=1 // pred_region
      %s22 = ssub.s32 64, 64
      %23 = vsyncadd [#allocation3], %s22
      %s25 = sshll.u32 [#allocation2], 4
      %s26 = int_to_ptr.vmem [resolvable:$true] %s25
      %28 = dma.hbm_to_vmem [thread:$0]  %s0, 64, %s26, [#allocation3]
    $region5: #{tpu_custom_call.1} parent=1 // pred_fallthru
      _
    // Predicated region
    $region6: #{tpu_custom_call.1} parent=1 // pred_check
      _
    $region7: #{tpu_custom_call.1} parent=1 // pred_check_branch
      %30 = sbr.rel (0) target = $region9
    $region8: #{tpu_custom_call.1} parent=1 // pred_region
      %s32 = ssub.s32 128, 128
      %33 = vsyncadd [#allocation6], %s32
      %s35 = sshll.u32 [#allocation5], 4
      %s36 = int_to_ptr.vmem [resolvable:$true] %s35
      %38 = dma.hbm_to_vmem [thread:$0]  %s1, 128, %s36, [#allocation6]
    $region9: #{tpu_custom_call.1} parent=1 // pred_fallthru
      _
    // Predicated region
    $region10: #{tpu_custom_call.1} parent=1 // pred_check
      _
    $region11: #{tpu_custom_call.1} parent=1 // pred_check_branch
      %40 = sbr.rel (0) target = $region13
    $region12: #{tpu_custom_call.1} parent=1 // pred_region
      %s42 = ssub.s32 1024, 1024
      %43 = vsyncadd [#allocation6], %s42
      %s44 = sshll.u32 [#allocation7], 4
      %s45 = int_to_ptr.vmem [resolvable:$true] %s44
      %50 = dma.hbm_to_vmem [thread:$0]  %s2, 1024, %s45, [#allocation6], 64, 64, 4
    $region13: #{tpu_custom_call.1} parent=1 // pred_fallthru
      _
    // Predicated region
    $region14: #{tpu_custom_call.1} parent=1 // pred_check
      _
    $region15: #{tpu_custom_call.1} parent=1 // pred_check_branch
      %52 = sbr.rel (0) target = $region17
    $region16: #{tpu_custom_call.1} parent=1 // pred_region
      %s54 = ssub.s32 1024, 1024
      %55 = vsyncadd [#allocation9], %s54
      %s56 = sshll.u32 [#allocation8], 4
      %s57 = int_to_ptr.vmem [resolvable:$true] %s56
      %62 = dma.hbm_to_vmem [thread:$0]  %s3, 1024, %s57, [#allocation9], 64, 64, 4
    $region17: #{tpu_custom_call.1} parent=1 // pred_fallthru
      _
    // Predicated region
    $region18: #{tpu_custom_call.1} parent=1 // pred_check
      _
    $region19: #{tpu_custom_call.1} parent=1 // pred_check_branch
      %64 = sbr.rel (0) target = $region21
    $region20: #{tpu_custom_call.1} parent=1 // pred_region
      %s66 = ssub.s32 1024, 1024
      %67 = vsyncadd [#allocation9], %s66
      %s68 = sshll.u32 [#allocation10], 4
      %s69 = int_to_ptr.vmem [resolvable:$true] %s68
      %74 = dma.hbm_to_vmem [thread:$0]  %s4, 1024, %s69, [#allocation9], 64, 64, 4
    $region21: #{tpu_custom_call.1} parent=1 // pred_fallthru
      _
    // Predicated region
    $region22: #{tpu_custom_call.1} parent=1 // pred_check
      _
    $region23: #{tpu_custom_call.1} parent=1 // pred_check_branch
      %76 = sbr.rel (0) target = $region25
    $region24: #{tpu_custom_call.1} parent=1 // pred_region
      %s78 = ssub.s32 1024, 1024
      %79 = vsyncadd [#allocation12], %s78
      %s80 = sshll.u32 [#allocation11], 4
      %s81 = int_to_ptr.vmem [resolvable:$true] %s80
      %86 = dma.hbm_to_vmem [thread:$0]  %s5, 1024, %s81, [#allocation12], 64, 64, 4
    $region25: #{tpu_custom_call.1} parent=1 // pred_fallthru
      _
    // Predicated region
    $region26: #{tpu_custom_call.1} parent=1 // pred_check
      _
    $region27: #{tpu_custom_call.1} parent=1 // pred_check_branch
      %88 = sbr.rel (0) target = $region29
    $region28: #{tpu_custom_call.1} parent=1 // pred_region
      %s90 = ssub.s32 1024, 1024
      %91 = vsyncadd [#allocation12], %s90
      %s92 = sshll.u32 [#allocation13], 4
      %s93 = int_to_ptr.vmem [resolvable:$true] %s92
      %98 = dma.hbm_to_vmem [thread:$0]  %s6, 1024, %s93, [#allocation12], 64, 64, 4
    $region29: #{tpu_custom_call.1} parent=1 // pred_fallthru
      _
    // Predicated region
    $region30: #{tpu_custom_call.1} parent=1 // pred_check
      _
    $region31: #{tpu_custom_call.1} parent=1 // pred_check_branch
      %100 = sbr.rel (0) target = $region33
    $region32: #{tpu_custom_call.1} parent=1 // pred_region
      %s102 = ssub.s32 1024, 1024
      %103 = vsyncadd [#allocation15], %s102
      %s104 = sshll.u32 [#allocation14], 4
      %s105 = int_to_ptr.vmem [resolvable:$true] %s104
      %110 = dma.hbm_to_vmem [thread:$0]  %s7, 1024, %s105, [#allocation15], 64, 64, 4
    $region33: #{tpu_custom_call.1} parent=1 // pred_fallthru
      _
    // Predicated region
    $region34: #{tpu_custom_call.1} parent=1 // pred_check
      _
    $region35: #{tpu_custom_call.1} parent=1 // pred_check_branch
      %112 = sbr.rel (0) target = $region37
    $region36: #{tpu_custom_call.1} parent=1 // pred_region
      %113 = dma.done [#allocation3], 64
    $region37: #{tpu_custom_call.1} parent=1 // pred_fallthru
      _
    // Predicated region
    $region38: #{tpu_custom_call.1} parent=1 // pred_check
      _
    $region39: #{tpu_custom_call.1} parent=1 // pred_check_branch
      %115 = sbr.rel (0) target = $region41
    $region40: #{tpu_custom_call.1} parent=1 // pred_region
      %116 = dma.done [#allocation6], 128
    $region41: #{tpu_custom_call.1} parent=1 // pred_fallthru
      _
    // Predicated region
    $region42: #{tpu_custom_call.1} parent=1 // pred_check
      _
    $region43: #{tpu_custom_call.1} parent=1 // pred_check_branch
      %118 = sbr.rel (0) target = $region45
    $region44: #{tpu_custom_call.1} parent=1 // pred_region
      %119 = dma.done [#allocation6], 1024
    $region45: #{tpu_custom_call.1} parent=1 // pred_fallthru
      _
    // Predicated region
    $region46: #{tpu_custom_call.1} parent=1 // pred_check
      _
    $region47: #{tpu_custom_call.1} parent=1 // pred_check_branch
      %121 = sbr.rel (0) target = $region49
    $region48: #{tpu_custom_call.1} parent=1 // pred_region
      %122 = dma.done [#allocation9], 1024
    $region49: #{tpu_custom_call.1} parent=1 // pred_fallthru
      _
    // Predicated region
    $region50: #{tpu_custom_call.1} parent=1 // pred_check
      _
    $region51: #{tpu_custom_call.1} parent=1 // pred_check_branch
      %124 = sbr.rel (0) target = $region53
    $region52: #{tpu_custom_call.1} parent=1 // pred_region
      %125 = dma.done [#allocation9], 1024
    $region53: #{tpu_custom_call.1} parent=1 // pred_fallthru
      _
    // Predicated region
    $region54: #{tpu_custom_call.1} parent=1 // pred_check
      _
    $region55: #{tpu_custom_call.1} parent=1 // pred_check_branch
      %127 = sbr.rel (0) target = $region57
    $region56: #{tpu_custom_call.1} parent=1 // pred_region
      %128 = dma.done [#allocation12], 1024
    $region57: #{tpu_custom_call.1} parent=1 // pred_fallthru
      _
    // Predicated region
    $region58: #{tpu_custom_call.1} parent=1 // pred_check
      _
    $region59: #{tpu_custom_call.1} parent=1 // pred_check_branch
      %130 = sbr.rel (0) target = $region61
    $region60: #{tpu_custom_call.1} parent=1 // pred_region
      %131 = dma.done [#allocation12], 1024
    $region61: #{tpu_custom_call.1} parent=1 // pred_fallthru
      _
    // Predicated region
    $region62: #{tpu_custom_call.1} parent=1 // pred_check
      _
    $region63: #{tpu_custom_call.1} parent=1 // pred_check_branch
      %133 = sbr.rel (0) target = $region65
    $region64: #{tpu_custom_call.1} parent=1 // pred_region
      %134 = dma.done [#allocation15], 1024
    $region65: #{tpu_custom_call.1} parent=1 // pred_fallthru
      _
    %s136 = smul.u32 0, 128
    %v137 = vld [vmem:[#allocation2] sm:$0xf]
    %v138 = vld [vmem:[#allocation5] sm:$0xff]
    %v139 = vpack.c.bf16 %v138, %v138
    %v140 = vld [vmem:[#allocation7] sm:$0xf]
    %v141 = vld [vmem:[#allocation7 + $0x4] sm:$0xf]
    %v142 = vld [vmem:[#allocation7 + $0x8] sm:$0xf]
    %v143 = vld [vmem:[#allocation7 + $0xc] sm:$0xf]
    %v144 = vld [vmem:[#allocation7 + $0x10] sm:$0xf]
    %v145 = vld [vmem:[#allocation7 + $0x14] sm:$0xf]
    %v146 = vld [vmem:[#allocation7 + $0x18] sm:$0xf]
    %v147 = vld [vmem:[#allocation7 + $0x1c] sm:$0xf]
    %v148 = vld [vmem:[#allocation7 + $0x20] sm:$0xf]
    %v149 = vld [vmem:[#allocation7 + $0x24] sm:$0xf]
    %v150 = vld [vmem:[#allocation7 + $0x28] sm:$0xf]
    %v151 = vld [vmem:[#allocation7 + $0x2c] sm:$0xf]
    %v152 = vld [vmem:[#allocation7 + $0x30] sm:$0xf]
    %v153 = vld [vmem:[#allocation7 + $0x34] sm:$0xf]
    %v154 = vld [vmem:[#allocation7 + $0x38] sm:$0xf]
    %v155 = vld [vmem:[#allocation7 + $0x3c] sm:$0xf]
    %v172 = vunpack.c.l.b16 %v140
    %v173 = vunpack.c.l.b16 %v141
    %v174 = vunpack.c.l.b16 %v142
    %v175 = vunpack.c.l.b16 %v143
    %v176 = vunpack.c.l.b16 %v144
    %v177 = vunpack.c.l.b16 %v145
    %v178 = vunpack.c.l.b16 %v146
    %v179 = vunpack.c.l.b16 %v147
    %v180 = vunpack.c.l.b16 %v148
    %v181 = vunpack.c.l.b16 %v149
    %v182 = vunpack.c.l.b16 %v150
    %v183 = vunpack.c.l.b16 %v151
    %v184 = vunpack.c.l.b16 %v152
    %v185 = vunpack.c.l.b16 %v153
    %v186 = vunpack.c.l.b16 %v154
    %v187 = vunpack.c.l.b16 %v155
    %v188 = vpack.c.b16 %v173, %v172
    %v189 = vpack.c.b16 %v175, %v174
    %v190 = vpack.c.b16 %v177, %v176
    %v191 = vpack.c.b16 %v179, %v178
    %v192 = vpack.c.b16 %v181, %v180
    %v193 = vpack.c.b16 %v183, %v182
    %v194 = vpack.c.b16 %v185, %v184
    %v195 = vpack.c.b16 %v187, %v186
    %204 = vmatprep.subr.bf16.mxu0 0
    %205 = vmatpush1.bf16.msra.mxu0 %v188
    %206 = vmatprep.subr.bf16.mxu0 0
    %207 = vmatpush1.bf16.msra.mxu0 %v189
    %208 = vmatprep.subr.bf16.mxu0 0
    %209 = vmatpush1.bf16.msra.mxu0 %v190
    %210 = vmatprep.subr.bf16.mxu0 0
    %211 = vmatpush1.bf16.msra.mxu0 %v191
    %212 = vmatprep.subr.bf16.mxu0 0
    %213 = vmatpush1.bf16.msra.mxu0 %v192
    %214 = vmatprep.subr.bf16.mxu0 0
    %215 = vmatpush1.bf16.msra.mxu0 %v193
    %216 = vmatprep.subr.bf16.mxu0 0
    %217 = vmatpush1.bf16.msra.mxu0 %v194
    %218 = vmatprep.subr.bf16.mxu0 0
    %219 = vmatpush1.bf16.msra.mxu0 %v195
    %220 = vmatprep.subr.bf16.mxu0 0
    %221 = vmatpush1.bf16.msra.mxu0 0
    %222 = vmatprep.subr.bf16.mxu0 0
    %223 = vmatpush1.bf16.msra.mxu0 0
    %224 = vmatprep.subr.bf16.mxu0 0
    %225 = vmatpush1.bf16.msra.mxu0 0
    %226 = vmatprep.subr.bf16.mxu0 0
    %227 = vmatpush1.bf16.msra.mxu0 0
    %228 = vmatprep.subr.bf16.mxu0 0
    %229 = vmatpush1.bf16.msra.mxu0 0
    %230 = vmatprep.subr.bf16.mxu0 0
    %231 = vmatpush1.bf16.msra.mxu0 0
    %232 = vmatprep.subr.bf16.mxu0 0
    %233 = vmatpush1.bf16.msra.mxu0 0
    %234 = vmatprep.subr.bf16.mxu0 0
    %235 = vmatpush1.bf16.msra.mxu0 0
    %236 = vmatprep.mubr.bf16.mxu0 0
    %237 = vmatmul.mubr.bf16.gmra.mrb[0].mxu0 %v137
    %v238 = vpop.f32.mrb[0].mxu0
    %v239 = vadd.f32 0.0, %v238
    %v240 = vpop.f32.mrb[0].mxu0
    %v241 = vpop.f32.mrb[0].mxu0
    %v242 = vpop.f32.mrb[0].mxu0
    %243 = vdwg.mxu0
    %v244 = vld [vmem:[#allocation8] sm:$0xf]
    %v245 = vld [vmem:[#allocation8 + $0x4] sm:$0xf]
    %v246 = vld [vmem:[#allocation8 + $0x8] sm:$0xf]
    %v247 = vld [vmem:[#allocation8 + $0xc] sm:$0xf]
    %v248 = vld [vmem:[#allocation8 + $0x10] sm:$0xf]
    %v249 = vld [vmem:[#allocation8 + $0x14] sm:$0xf]
    %v250 = vld [vmem:[#allocation8 + $0x18] sm:$0xf]
    %v251 = vld [vmem:[#allocation8 + $0x1c] sm:$0xf]
    %v252 = vld [vmem:[#allocation8 + $0x20] sm:$0xf]
    %v253 = vld [vmem:[#allocation8 + $0x24] sm:$0xf]
    %v254 = vld [vmem:[#allocation8 + $0x28] sm:$0xf]
    %v255 = vld [vmem:[#allocation8 + $0x2c] sm:$0xf]
    %v256 = vld [vmem:[#allocation8 + $0x30] sm:$0xf]
    %v257 = vld [vmem:[#allocation8 + $0x34] sm:$0xf]
    %v258 = vld [vmem:[#allocation8 + $0x38] sm:$0xf]
    %v259 = vld [vmem:[#allocation8 + $0x3c] sm:$0xf]
    %v276 = vunpack.c.l.b16 %v244
    %v277 = vunpack.c.l.b16 %v245
    %v278 = vunpack.c.l.b16 %v246
    %v279 = vunpack.c.l.b16 %v247
    %v280 = vunpack.c.l.b16 %v248
    %v281 = vunpack.c.l.b16 %v249
    %v282 = vunpack.c.l.b16 %v250
    %v283 = vunpack.c.l.b16 %v251
    %v284 = vunpack.c.l.b16 %v252
    %v285 = vunpack.c.l.b16 %v253
    %v286 = vunpack.c.l.b16 %v254
    %v287 = vunpack.c.l.b16 %v255
    %v288 = vunpack.c.l.b16 %v256
    %v289 = vunpack.c.l.b16 %v257
    %v290 = vunpack.c.l.b16 %v258
    %v291 = vunpack.c.l.b16 %v259
    %v292 = vpack.c.b16 %v277, %v276
    %v293 = vpack.c.b16 %v279, %v278
    %v294 = vpack.c.b16 %v281, %v280
    %v295 = vpack.c.b16 %v283, %v282
    %v296 = vpack.c.b16 %v285, %v284
    %v297 = vpack.c.b16 %v287, %v286
    %v298 = vpack.c.b16 %v289, %v288
    %v299 = vpack.c.b16 %v291, %v290
    %308 = vmatprep.subr.bf16.mxu0 0
    %309 = vmatpush1.bf16.msra.mxu0 %v292
    %310 = vmatprep.subr.bf16.mxu0 0
    %311 = vmatpush1.bf16.msra.mxu0 %v293
    %312 = vmatprep.subr.bf16.mxu0 0
    %313 = vmatpush1.bf16.msra.mxu0 %v294
    %314 = vmatprep.subr.bf16.mxu0 0
    %315 = vmatpush1.bf16.msra.mxu0 %v295
    %316 = vmatprep.subr.bf16.mxu0 0
    %317 = vmatpush1.bf16.msra.mxu0 %v296
    %318 = vmatprep.subr.bf16.mxu0 0
    %319 = vmatpush1.bf16.msra.mxu0 %v297
    %320 = vmatprep.subr.bf16.mxu0 0
    %321 = vmatpush1.bf16.msra.mxu0 %v298
    %322 = vmatprep.subr.bf16.mxu0 0
    %323 = vmatpush1.bf16.msra.mxu0 %v299
    %324 = vmatprep.subr.bf16.mxu0 0
    %325 = vmatpush1.bf16.msra.mxu0 0
    %326 = vmatprep.subr.bf16.mxu0 0
    %327 = vmatpush1.bf16.msra.mxu0 0
    %328 = vmatprep.subr.bf16.mxu0 0
    %329 = vmatpush1.bf16.msra.mxu0 0
    %330 = vmatprep.subr.bf16.mxu0 0
    %331 = vmatpush1.bf16.msra.mxu0 0
    %332 = vmatprep.subr.bf16.mxu0 0
    %333 = vmatpush1.bf16.msra.mxu0 0
    %334 = vmatprep.subr.bf16.mxu0 0
    %335 = vmatpush1.bf16.msra.mxu0 0
    %336 = vmatprep.subr.bf16.mxu0 0
    %337 = vmatpush1.bf16.msra.mxu0 0
    %338 = vmatprep.subr.bf16.mxu0 0
    %339 = vmatpush1.bf16.msra.mxu0 0
    %340 = vmatprep.mubr.bf16.mxu0 0
    %341 = vmatmul.mubr.bf16.gmra.mrb[0].mxu0 %v137
    %v342 = vpop.f32.mrb[0].mxu0
    %v343 = vadd.f32 0.0, %v342
    %v344 = vpop.f32.mrb[0].mxu0
    %v345 = vpop.f32.mrb[0].mxu0
    %v346 = vpop.f32.mrb[0].mxu0
    %347 = vdwg.mxu0
    %v348 = vld [vmem:[#allocation10] sm:$0xf]
    %v349 = vld [vmem:[#allocation10 + $0x4] sm:$0xf]
    %v350 = vld [vmem:[#allocation10 + $0x8] sm:$0xf]
    %v351 = vld [vmem:[#allocation10 + $0xc] sm:$0xf]
    %v352 = vld [vmem:[#allocation10 + $0x10] sm:$0xf]
    %v353 = vld [vmem:[#allocation10 + $0x14] sm:$0xf]
    %v354 = vld [vmem:[#allocation10 + $0x18] sm:$0xf]
    %v355 = vld [vmem:[#allocation10 + $0x1c] sm:$0xf]
    %v356 = vld [vmem:[#allocation10 + $0x20] sm:$0xf]
    %v357 = vld [vmem:[#allocation10 + $0x24] sm:$0xf]
    %v358 = vld [vmem:[#allocation10 + $0x28] sm:$0xf]
    %v359 = vld [vmem:[#allocation10 + $0x2c] sm:$0xf]
    %v360 = vld [vmem:[#allocation10 + $0x30] sm:$0xf]
    %v361 = vld [vmem:[#allocation10 + $0x34] sm:$0xf]
    %v362 = vld [vmem:[#allocation10 + $0x38] sm:$0xf]
    %v363 = vld [vmem:[#allocation10 + $0x3c] sm:$0xf]
    %v380 = vunpack.c.l.b16 %v348
    %v381 = vunpack.c.l.b16 %v349
    %v382 = vunpack.c.l.b16 %v350
    %v383 = vunpack.c.l.b16 %v351
    %v384 = vunpack.c.l.b16 %v352
    %v385 = vunpack.c.l.b16 %v353
    %v386 = vunpack.c.l.b16 %v354
    %v387 = vunpack.c.l.b16 %v355
    %v388 = vunpack.c.l.b16 %v356
    %v389 = vunpack.c.l.b16 %v357
    %v390 = vunpack.c.l.b16 %v358
    %v391 = vunpack.c.l.b16 %v359
    %v392 = vunpack.c.l.b16 %v360
    %v393 = vunpack.c.l.b16 %v361
    %v394 = vunpack.c.l.b16 %v362
    %v395 = vunpack.c.l.b16 %v363
    %v396 = vpack.c.b16 %v381, %v380
    %v397 = vpack.c.b16 %v383, %v382
    %v398 = vpack.c.b16 %v385, %v384
    %v399 = vpack.c.b16 %v387, %v386
    %v400 = vpack.c.b16 %v389, %v388
    %v401 = vpack.c.b16 %v391, %v390
    %v402 = vpack.c.b16 %v393, %v392
    %v403 = vpack.c.b16 %v395, %v394
    %412 = vmatprep.subr.bf16.mxu0 0
    %413 = vmatpush1.bf16.msra.mxu0 %v396
    %414 = vmatprep.subr.bf16.mxu0 0
    %415 = vmatpush1.bf16.msra.mxu0 %v397
    %416 = vmatprep.subr.bf16.mxu0 0
    %417 = vmatpush1.bf16.msra.mxu0 %v398
    %418 = vmatprep.subr.bf16.mxu0 0
    %419 = vmatpush1.bf16.msra.mxu0 %v399
    %420 = vmatprep.subr.bf16.mxu0 0
    %421 = vmatpush1.bf16.msra.mxu0 %v400
    %422 = vmatprep.subr.bf16.mxu0 0
    %423 = vmatpush1.bf16.msra.mxu0 %v401
    %424 = vmatprep.subr.bf16.mxu0 0
    %425 = vmatpush1.bf16.msra.mxu0 %v402
    %426 = vmatprep.subr.bf16.mxu0 0
    %427 = vmatpush1.bf16.msra.mxu0 %v403
    %428 = vmatprep.subr.bf16.mxu0 0
    %429 = vmatpush1.bf16.msra.mxu0 0
    %430 = vmatprep.subr.bf16.mxu0 0
    %431 = vmatpush1.bf16.msra.mxu0 0
    %432 = vmatprep.subr.bf16.mxu0 0
    %433 = vmatpush1.bf16.msra.mxu0 0
    %434 = vmatprep.subr.bf16.mxu0 0
    %435 = vmatpush1.bf16.msra.mxu0 0
    %436 = vmatprep.subr.bf16.mxu0 0
    %437 = vmatpush1.bf16.msra.mxu0 0
    %438 = vmatprep.subr.bf16.mxu0 0
    %439 = vmatpush1.bf16.msra.mxu0 0
    %440 = vmatprep.subr.bf16.mxu0 0
    %441 = vmatpush1.bf16.msra.mxu0 0
    %442 = vmatprep.subr.bf16.mxu0 0
    %443 = vmatpush1.bf16.msra.mxu0 0
    %444 = vmatprep.mubr.bf16.mxu0 0
    %445 = vmatmul.mubr.bf16.gmra.mrb[0].mxu0 %v137
    %v446 = vpop.f32.mrb[0].mxu0
    %v447 = vadd.f32 0.0, %v446
    %v448 = vpop.f32.mrb[0].mxu0
    %v449 = vpop.f32.mrb[0].mxu0
    %v450 = vpop.f32.mrb[0].mxu0
    %451 = vdwg.mxu0
    %v452 = vld [vmem:[#allocation11] sm:$0xf]
    %v453 = vld [vmem:[#allocation11 + $0x4] sm:$0xf]
    %v454 = vld [vmem:[#allocation11 + $0x8] sm:$0xf]
    %v455 = vld [vmem:[#allocation11 + $0xc] sm:$0xf]
    %v456 = vld [vmem:[#allocation11 + $0x10] sm:$0xf]
    %v457 = vld [vmem:[#allocation11 + $0x14] sm:$0xf]
    %v458 = vld [vmem:[#allocation11 + $0x18] sm:$0xf]
    %v459 = vld [vmem:[#allocation11 + $0x1c] sm:$0xf]
    %v460 = vld [vmem:[#allocation11 + $0x20] sm:$0xf]
    %v461 = vld [vmem:[#allocation11 + $0x24] sm:$0xf]
    %v462 = vld [vmem:[#allocation11 + $0x28] sm:$0xf]
    %v463 = vld [vmem:[#allocation11 + $0x2c] sm:$0xf]
    %v464 = vld [vmem:[#allocation11 + $0x30] sm:$0xf]
    %v465 = vld [vmem:[#allocation11 + $0x34] sm:$0xf]
    %v466 = vld [vmem:[#allocation11 + $0x38] sm:$0xf]
    %v467 = vld [vmem:[#allocation11 + $0x3c] sm:$0xf]
    %v484 = vunpack.c.l.b16 %v452
    %v485 = vunpack.c.l.b16 %v453
    %v486 = vunpack.c.l.b16 %v454
    %v487 = vunpack.c.l.b16 %v455
    %v488 = vunpack.c.l.b16 %v456
    %v489 = vunpack.c.l.b16 %v457
    %v490 = vunpack.c.l.b16 %v458
    %v491 = vunpack.c.l.b16 %v459
    %v492 = vunpack.c.l.b16 %v460
    %v493 = vunpack.c.l.b16 %v461
    %v494 = vunpack.c.l.b16 %v462
    %v495 = vunpack.c.l.b16 %v463
    %v496 = vunpack.c.l.b16 %v464
    %v497 = vunpack.c.l.b16 %v465
    %v498 = vunpack.c.l.b16 %v466
    %v499 = vunpack.c.l.b16 %v467
    %v500 = vpack.c.b16 %v485, %v484
    %v501 = vpack.c.b16 %v487, %v486
    %v502 = vpack.c.b16 %v489, %v488
    %v503 = vpack.c.b16 %v491, %v490
    %v504 = vpack.c.b16 %v493, %v492
    %v505 = vpack.c.b16 %v495, %v494
    %v506 = vpack.c.b16 %v497, %v496
    %v507 = vpack.c.b16 %v499, %v498
    %516 = vmatprep.subr.bf16.mxu0 0
    %517 = vmatpush1.bf16.msra.mxu0 %v500
    %518 = vmatprep.subr.bf16.mxu0 0
    %519 = vmatpush1.bf16.msra.mxu0 %v501
    %520 = vmatprep.subr.bf16.mxu0 0
    %521 = vmatpush1.bf16.msra.mxu0 %v502
    %522 = vmatprep.subr.bf16.mxu0 0
    %523 = vmatpush1.bf16.msra.mxu0 %v503
    %524 = vmatprep.subr.bf16.mxu0 0
    %525 = vmatpush1.bf16.msra.mxu0 %v504
    %526 = vmatprep.subr.bf16.mxu0 0
    %527 = vmatpush1.bf16.msra.mxu0 %v505
    %528 = vmatprep.subr.bf16.mxu0 0
    %529 = vmatpush1.bf16.msra.mxu0 %v506
    %530 = vmatprep.subr.bf16.mxu0 0
    %531 = vmatpush1.bf16.msra.mxu0 %v507
    %532 = vmatprep.subr.bf16.mxu0 0
    %533 = vmatpush1.bf16.msra.mxu0 0
    %534 = vmatprep.subr.bf16.mxu0 0
    %535 = vmatpush1.bf16.msra.mxu0 0
    %536 = vmatprep.subr.bf16.mxu0 0
    %537 = vmatpush1.bf16.msra.mxu0 0
    %538 = vmatprep.subr.bf16.mxu0 0
    %539 = vmatpush1.bf16.msra.mxu0 0
    %540 = vmatprep.subr.bf16.mxu0 0
    %541 = vmatpush1.bf16.msra.mxu0 0
    %542 = vmatprep.subr.bf16.mxu0 0
    %543 = vmatpush1.bf16.msra.mxu0 0
    %544 = vmatprep.subr.bf16.mxu0 0
    %545 = vmatpush1.bf16.msra.mxu0 0
    %546 = vmatprep.subr.bf16.mxu0 0
    %547 = vmatpush1.bf16.msra.mxu0 0
    %548 = vmatprep.mubr.bf16.mxu0 0
    %549 = vmatmul.mubr.bf16.gmra.mrb[0].mxu0 %v139
    %v550 = vpop.f32.mrb[0].mxu0
    %v551 = vadd.f32 0.0, %v550
    %v552 = vpop.f32.mrb[0].mxu0
    %v553 = vpop.f32.mrb[0].mxu0
    %v554 = vpop.f32.mrb[0].mxu0
    %555 = vdwg.mxu0
    %v556 = vld [vmem:[#allocation13] sm:$0xf]
    %v557 = vld [vmem:[#allocation13 + $0x4] sm:$0xf]
    %v558 = vld [vmem:[#allocation13 + $0x8] sm:$0xf]
    %v559 = vld [vmem:[#allocation13 + $0xc] sm:$0xf]
    %v560 = vld [vmem:[#allocation13 + $0x10] sm:$0xf]
    %v561 = vld [vmem:[#allocation13 + $0x14] sm:$0xf]
    %v562 = vld [vmem:[#allocation13 + $0x18] sm:$0xf]
    %v563 = vld [vmem:[#allocation13 + $0x1c] sm:$0xf]
    %v564 = vld [vmem:[#allocation13 + $0x20] sm:$0xf]
    %v565 = vld [vmem:[#allocation13 + $0x24] sm:$0xf]
    %v566 = vld [vmem:[#allocation13 + $0x28] sm:$0xf]
    %v567 = vld [vmem:[#allocation13 + $0x2c] sm:$0xf]
    %v568 = vld [vmem:[#allocation13 + $0x30] sm:$0xf]
    %v569 = vld [vmem:[#allocation13 + $0x34] sm:$0xf]
    %v570 = vld [vmem:[#allocation13 + $0x38] sm:$0xf]
    %v571 = vld [vmem:[#allocation13 + $0x3c] sm:$0xf]
    %v588 = vunpack.c.l.b16 %v556
    %v589 = vunpack.c.l.b16 %v557
    %v590 = vunpack.c.l.b16 %v558
    %v591 = vunpack.c.l.b16 %v559
    %v592 = vunpack.c.l.b16 %v560
    %v593 = vunpack.c.l.b16 %v561
    %v594 = vunpack.c.l.b16 %v562
    %v595 = vunpack.c.l.b16 %v563
    %v596 = vunpack.c.l.b16 %v564
    %v597 = vunpack.c.l.b16 %v565
    %v598 = vunpack.c.l.b16 %v566
    %v599 = vunpack.c.l.b16 %v567
    %v600 = vunpack.c.l.b16 %v568
    %v601 = vunpack.c.l.b16 %v569
    %v602 = vunpack.c.l.b16 %v570
    %v603 = vunpack.c.l.b16 %v571
    %v604 = vpack.c.b16 %v589, %v588
    %v605 = vpack.c.b16 %v591, %v590
    %v606 = vpack.c.b16 %v593, %v592
    %v607 = vpack.c.b16 %v595, %v594
    %v608 = vpack.c.b16 %v597, %v596
    %v609 = vpack.c.b16 %v599, %v598
    %v610 = vpack.c.b16 %v601, %v600
    %v611 = vpack.c.b16 %v603, %v602
    %620 = vmatprep.subr.bf16.mxu0 0
    %621 = vmatpush1.bf16.msra.mxu0 %v604
    %622 = vmatprep.subr.bf16.mxu0 0
    %623 = vmatpush1.bf16.msra.mxu0 %v605
    %624 = vmatprep.subr.bf16.mxu0 0
    %625 = vmatpush1.bf16.msra.mxu0 %v606
    %626 = vmatprep.subr.bf16.mxu0 0
    %627 = vmatpush1.bf16.msra.mxu0 %v607
    %628 = vmatprep.subr.bf16.mxu0 0
    %629 = vmatpush1.bf16.msra.mxu0 %v608
    %630 = vmatprep.subr.bf16.mxu0 0
    %631 = vmatpush1.bf16.msra.mxu0 %v609
    %632 = vmatprep.subr.bf16.mxu0 0
    %633 = vmatpush1.bf16.msra.mxu0 %v610
    %634 = vmatprep.subr.bf16.mxu0 0
    %635 = vmatpush1.bf16.msra.mxu0 %v611
    %636 = vmatprep.subr.bf16.mxu0 0
    %637 = vmatpush1.bf16.msra.mxu0 0
    %638 = vmatprep.subr.bf16.mxu0 0
    %639 = vmatpush1.bf16.msra.mxu0 0
    %640 = vmatprep.subr.bf16.mxu0 0
    %641 = vmatpush1.bf16.msra.mxu0 0
    %642 = vmatprep.subr.bf16.mxu0 0
    %643 = vmatpush1.bf16.msra.mxu0 0
    %644 = vmatprep.subr.bf16.mxu0 0
    %645 = vmatpush1.bf16.msra.mxu0 0
    %646 = vmatprep.subr.bf16.mxu0 0
    %647 = vmatpush1.bf16.msra.mxu0 0
    %648 = vmatprep.subr.bf16.mxu0 0
    %649 = vmatpush1.bf16.msra.mxu0 0
    %650 = vmatprep.subr.bf16.mxu0 0
    %651 = vmatpush1.bf16.msra.mxu0 0
    %652 = vmatprep.mubr.bf16.mxu0 0
    %653 = vmatmul.mubr.bf16.gmra.mrb[0].mxu0 %v139
    %v654 = vpop.f32.mrb[0].mxu0
    %v655 = vadd.f32 0.0, %v654
    %v656 = vpop.f32.mrb[0].mxu0
    %v657 = vpop.f32.mrb[0].mxu0
    %v658 = vpop.f32.mrb[0].mxu0
    %659 = vdwg.mxu0
    %v660 = vld [vmem:[#allocation14] sm:$0xf]
    %v661 = vld [vmem:[#allocation14 + $0x4] sm:$0xf]
    %v662 = vld [vmem:[#allocation14 + $0x8] sm:$0xf]
    %v663 = vld [vmem:[#allocation14 + $0xc] sm:$0xf]
    %v664 = vld [vmem:[#allocation14 + $0x10] sm:$0xf]
    %v665 = vld [vmem:[#allocation14 + $0x14] sm:$0xf]
    %v666 = vld [vmem:[#allocation14 + $0x18] sm:$0xf]
    %v667 = vld [vmem:[#allocation14 + $0x1c] sm:$0xf]
    %v668 = vld [vmem:[#allocation14 + $0x20] sm:$0xf]
    %v669 = vld [vmem:[#allocation14 + $0x24] sm:$0xf]
    %v670 = vld [vmem:[#allocation14 + $0x28] sm:$0xf]
    %v671 = vld [vmem:[#allocation14 + $0x2c] sm:$0xf]
    %v672 = vld [vmem:[#allocation14 + $0x30] sm:$0xf]
    %v673 = vld [vmem:[#allocation14 + $0x34] sm:$0xf]
    %v674 = vld [vmem:[#allocation14 + $0x38] sm:$0xf]
    %v675 = vld [vmem:[#allocation14 + $0x3c] sm:$0xf]
    %v692 = vunpack.c.l.b16 %v660
    %v693 = vunpack.c.l.b16 %v661
    %v694 = vunpack.c.l.b16 %v662
    %v695 = vunpack.c.l.b16 %v663
    %v696 = vunpack.c.l.b16 %v664
    %v697 = vunpack.c.l.b16 %v665
    %v698 = vunpack.c.l.b16 %v666
    %v699 = vunpack.c.l.b16 %v667
    %v700 = vunpack.c.l.b16 %v668
    %v701 = vunpack.c.l.b16 %v669
    %v702 = vunpack.c.l.b16 %v670
    %v703 = vunpack.c.l.b16 %v671
    %v704 = vunpack.c.l.b16 %v672
    %v705 = vunpack.c.l.b16 %v673
    %v706 = vunpack.c.l.b16 %v674
    %v707 = vunpack.c.l.b16 %v675
    %v708 = vpack.c.b16 %v693, %v692
    %v709 = vpack.c.b16 %v695, %v694
    %v710 = vpack.c.b16 %v697, %v696
    %v711 = vpack.c.b16 %v699, %v698
    %v712 = vpack.c.b16 %v701, %v700
    %v713 = vpack.c.b16 %v703, %v702
    %v714 = vpack.c.b16 %v705, %v704
    %v715 = vpack.c.b16 %v707, %v706
    %724 = vmatprep.subr.bf16.mxu0 0
    %725 = vmatpush1.bf16.msra.mxu0 %v708
    %726 = vmatprep.subr.bf16.mxu0 0
    %727 = vmatpush1.bf16.msra.mxu0 %v709
    %728 = vmatprep.subr.bf16.mxu0 0
    %729 = vmatpush1.bf16.msra.mxu0 %v710
    %730 = vmatprep.subr.bf16.mxu0 0
    %731 = vmatpush1.bf16.msra.mxu0 %v711
    %732 = vmatprep.subr.bf16.mxu0 0
    %733 = vmatpush1.bf16.msra.mxu0 %v712
    %734 = vmatprep.subr.bf16.mxu0 0
    %735 = vmatpush1.bf16.msra.mxu0 %v713
    %736 = vmatprep.subr.bf16.mxu0 0
    %737 = vmatpush1.bf16.msra.mxu0 %v714
    %738 = vmatprep.subr.bf16.mxu0 0
    %739 = vmatpush1.bf16.msra.mxu0 %v715
    %740 = vmatprep.subr.bf16.mxu0 0
    %741 = vmatpush1.bf16.msra.mxu0 0
    %742 = vmatprep.subr.bf16.mxu0 0
    %743 = vmatpush1.bf16.msra.mxu0 0
    %744 = vmatprep.subr.bf16.mxu0 0
    %745 = vmatpush1.bf16.msra.mxu0 0
    %746 = vmatprep.subr.bf16.mxu0 0
    %747 = vmatpush1.bf16.msra.mxu0 0
    %748 = vmatprep.subr.bf16.mxu0 0
    %749 = vmatpush1.bf16.msra.mxu0 0
    %750 = vmatprep.subr.bf16.mxu0 0
    %751 = vmatpush1.bf16.msra.mxu0 0
    %752 = vmatprep.subr.bf16.mxu0 0
    %753 = vmatpush1.bf16.msra.mxu0 0
    %754 = vmatprep.subr.bf16.mxu0 0
    %755 = vmatpush1.bf16.msra.mxu0 0
    %756 = vmatprep.mubr.bf16.mxu0 0
    %757 = vmatmul.mubr.bf16.gmra.mrb[0].mxu0 %v139
    %v758 = vpop.f32.mrb[0].mxu0
    %v759 = vadd.f32 0.0, %v758
    %v760 = vpop.f32.mrb[0].mxu0
    %v761 = vpop.f32.mrb[0].mxu0
    %v762 = vpop.f32.mrb[0].mxu0
    %763 = vdwg.mxu0
    %s764 = sshra.s32 %s136, 7
    %s765 = sand.u32 %s136, 127
    %s766 = scalar_lea.vmem [#allocation5], %s764
    %v767 = vld [vmem:[%s766] sm:$0xff]
    %v768 = vmul.f32 %v239, %v551
    %v769 = vmul.f32 %v768, 0.5
    %v770 = vtanh.pop %v769
    %v771 = vmul.f32 %v770, 0.5
    %v772 = vadd.f32 %v771, 0.5
    %v773 = vmul.f32 %v343, %v655
    %v774 = vmul.f32 %v773, 0.5
    %v775 = vtanh.pop %v774
    %v776 = vmul.f32 %v775, 0.5
    %v777 = vadd.f32 %v776, 0.5
    %v778 = vmul.f32 %v772, %v759
    %v779 = vmul.f32 %v447, %v778
    %vm780 = vcmp.gt.f32.partialorder %v779, 20.0
    %v781 = vmin.f32 %v779, 20.0
    %v782 = vmul.f32 %v781, 1.442695
    %v783 = vpow.pop %v782
    %v784 = vadd.f32 %v783, 1.0
    %v785 = vlog2.pop %v784
    %v786 = vmul.f32 %v785, 0.6931472
    %v787 = vmul.f32 -0.5, %v783
    %v788 = vadd.f32 %v787, 1.0
    %v789 = vmul.f32 %v788, %v783
    %v790 = vand.u32 2147483647, %v783
    %vm791 = vcmp.lt.f32.partialorder %v790, 0.0004427343
    %v792 = vsel %vm791, %v789, %v786
    %v793 = vsel %vm780, %v779, %v792
    %v794 = vsub.f32 1.0, %v777
    %v795 = vlog2.pop %v793
    %v796 = vmul.f32 %v795, 0.6931472
    %v797 = vmul.f32 %v794, %v796
    %v798 = vlog2.pop %v767
    %v799 = vmul.f32 %v798, 0.6931472
    %v800 = vmul.f32 %v777, %v799
    %v801 = vadd.f32 %v797, %v800
    %v802 = vmul.f32 %v801, 1.442695
    %v803 = vpow.pop %v802
    %804 = vst [vmem:[#allocation16] sm:$0xff] %v803
    // Predicated region
    $region66: #{tpu_custom_call.1} parent=1 // pred_check
      _
    $region67: #{tpu_custom_call.1} parent=1 // pred_check_branch
      %806 = sbr.rel (0) target = $region69
    $region68: #{tpu_custom_call.1} parent=1 // pred_region
      %s808 = ssub.s32 128, 128
      %809 = vsyncadd [#allocation4], %s808
      %s811 = sshll.u32 [#allocation16], 4
      %s812 = int_to_ptr.vmem [resolvable:$true] %s811
      %814 = dma.vmem_to_hbm [thread:$0]  %s812, 128, %s8, [#allocation4]
    $region69: #{tpu_custom_call.1} parent=1 // pred_fallthru
      _
    // Predicated region
    $region70: #{tpu_custom_call.1} parent=1 // pred_check
      _
    $region71: #{tpu_custom_call.1} parent=1 // pred_check_branch
      %816 = sbr.rel (0) target = $region73
    $region72: #{tpu_custom_call.1} parent=1 // pred_region
      %817 = dma.done [#allocation4], 128
    $region73: #{tpu_custom_call.1} parent=1 // pred_fallthru
      _
    %818 = vsyncpa [#allocation3], 1
    %819 = vsyncpa [#allocation6], 1
    %820 = vsyncpa [#allocation9], 1
    %821 = vsyncpa [#allocation12], 1
    %822 = vsyncpa [#allocation15], 1
    %823 = vsyncpa [#allocation4], 1

// kernel: tpu_custom_call.1
$region0: #{tpu_custom_call.1}
  #allocation0 [shape = 'u32[]', space=smem, size = 0x4, offset = 0x4, fixed_abs, tag = 'smem constant byte address 0x4 - core index']
  #allocation1 [shape = 'u32[144,128]{1,0:T(1,128)}', space=vmem, size = 0x12000, scoped, tag = 'internal scratch']
  %s0 = inlined_call_operand.hbm [shape: bf16[8,128], index: 0, kind: input, shape index: {}]
  %s1 = inlined_call_operand.hbm [shape: f32[8,128], index: 1, kind: input, shape index: {}]
  %s2 = inlined_call_operand.hbm [shape: bf16[128,128], index: 2, kind: input, shape index: {}]
  %s3 = inlined_call_operand.hbm [shape: bf16[128,128], index: 3, kind: input, shape index: {}]
  %s4 = inlined_call_operand.hbm [shape: bf16[128,128], index: 4, kind: input, shape index: {}]
  %s5 = inlined_call_operand.hbm [shape: bf16[128,128], index: 5, kind: input, shape index: {}]
  %s6 = inlined_call_operand.hbm [shape: bf16[128,128], index: 6, kind: input, shape index: {}]
  %s7 = inlined_call_operand.hbm [shape: bf16[128,128], index: 7, kind: input, shape index: {}]
  %s8 = inlined_call_operand.hbm [shape: f32[8,128], index: 8, kind: output, shape index: {}]
  %s9 = sld [smem:[#allocation0]]
  $region74: #{tpu_custom_call.1} parent=0
    _
  %s11 = ssub.s32 1, %s9
  %s12 = scalar_select 0, %s11, %s9
  $region1: #{tpu_custom_call.1} parent=0
    #allocation2 [shape = 'u8[2048]{0}', space=vmem, size = 0x800, scoped, tag = 'input window, operand 0, single buffered']
    #allocation3 [shape = 's32[1]{0}', space=sflag, size = 0x4, scoped, tag = 'scoped memory for tpu_custom_call.1']
    #allocation4 [shape = 's32[1]{0}', space=sflag, size = 0x4, scoped, tag = 'scoped memory for tpu_custom_call.1']
    #allocation5 [shape = 'u8[4096]{0}', space=vmem, size = 0x1000, scoped, tag = 'input window, operand 1, single buffered']
    #allocation6 [shape = 's32[1]{0}', space=sflag, size = 0x4, scoped, tag = 'scoped memory for tpu_custom_call.1']
    #allocation7 [shape = 'u8[32768]{0}', space=vmem, size = 0x8000, scoped, tag = 'input window, operand 2, single buffered']
    #allocation8 [shape = 'u8[32768]{0}', space=vmem, size = 0x8000, scoped, tag = 'input window, operand 3, single buffered']
    #allocation9 [shape = 's32[1]{0}', space=sflag, size = 0x4, scoped, tag = 'scoped memory for tpu_custom_call.1']
    #allocation10 [shape = 'u8[32768]{0}', space=vmem, size = 0x8000, scoped, tag = 'input window, operand 4, single buffered']
    #allocation11 [shape = 'u8[32768]{0}', space=vmem, size = 0x8000, scoped, tag = 'input window, operand 5, single buffered']
    #allocation12 [shape = 's32[1]{0}', space=sflag, size = 0x4, scoped, tag = 'scoped memory for tpu_custom_call.1']
    #allocation13 [shape = 'u8[32768]{0}', space=vmem, size = 0x8000, scoped, tag = 'input window, operand 6, single buffered']
    #allocation14 [shape = 'u8[32768]{0}', space=vmem, size = 0x8000, scoped, tag = 'input window, operand 7, single buffered']
    #allocation15 [shape = 's32[1]{0}', space=sflag, size = 0x4, scoped, tag = 'scoped memory for tpu_custom_call.1']
    #allocation16 [shape = 'u8[4096]{0}', space=vmem, size = 0x1000, scoped, tag = 'output window, operand 0, single buffered']
    %13 = vsyncpa [#allocation3], 0
    %14 = vsyncpa [#allocation6], 0
    %15 = vsyncpa [#allocation9], 0
    %16 = vsyncpa [#allocation12], 0
    %17 = vsyncpa [#allocation15], 0
    %18 = vsyncpa [#allocation4], 0
    // Predicated region
    $region2: #{tpu_custom_call.1} parent=1 // pred_check
      _
    $region3: #{tpu_custom_call.1} parent=1 // pred_check_branch
      %20 = sbr.rel (0) target = $region5
    $region4: #{tpu_custom_call.1} parent=1 // pred_region
      %s22 = ssub.s32 64, 64
      %23 = vsyncadd [#allocation3], %s22
      %s25 = sshll.u32 [#allocation2], 4
      %s26 = int_to_ptr.vmem [resolvable:$true] %s25
      %28 = dma.hbm_to_vmem [thread:$0]  %s0, 64, %s26, [#allocation3]
    $region5: #{tpu_custom_call.1} parent=1 // pred_fallthru
      _
    // Predicated region
    $region6: #{tpu_custom_call.1} parent=1 // pred_check
      _
    $region7: #{tpu_custom_call.1} parent=1 // pred_check_branch
      %30 = sbr.rel (0) target = $region9
    $region8: #{tpu_custom_call.1} parent=1 // pred_region
      %s32 = ssub.s32 128, 128
      %33 = vsyncadd [#allocation6], %s32
      %s35 = sshll.u32 [#allocation5], 4
      %s36 = int_to_ptr.vmem [resolvable:$true] %s35
      %38 = dma.hbm_to_vmem [thread:$0]  %s1, 128, %s36, [#allocation6]
    $region9: #{tpu_custom_call.1} parent=1 // pred_fallthru
      _
    // Predicated region
    $region10: #{tpu_custom_call.1} parent=1 // pred_check
      _
    $region11: #{tpu_custom_call.1} parent=1 // pred_check_branch
      %40 = sbr.rel (0) target = $region13
    $region12: #{tpu_custom_call.1} parent=1 // pred_region
      %s42 = ssub.s32 1024, 1024
      %43 = vsyncadd [#allocation6], %s42
      %s44 = sshll.u32 [#allocation7], 4
      %s45 = int_to_ptr.vmem [resolvable:$true] %s44
      %50 = dma.hbm_to_vmem [thread:$0]  %s2, 1024, %s45, [#allocation6], 64, 64, 4
    $region13: #{tpu_custom_call.1} parent=1 // pred_fallthru
      _
    // Predicated region
    $region14: #{tpu_custom_call.1} parent=1 // pred_check
      _
    $region15: #{tpu_custom_call.1} parent=1 // pred_check_branch
      %52 = sbr.rel (0) target = $region17
    $region16: #{tpu_custom_call.1} parent=1 // pred_region
      %s54 = ssub.s32 1024, 1024
      %55 = vsyncadd [#allocation9], %s54
      %s56 = sshll.u32 [#allocation8], 4
      %s57 = int_to_ptr.vmem [resolvable:$true] %s56
      %62 = dma.hbm_to_vmem [thread:$0]  %s3, 1024, %s57, [#allocation9], 64, 64, 4
    $region17: #{tpu_custom_call.1} parent=1 // pred_fallthru
      _
    // Predicated region
    $region18: #{tpu_custom_call.1} parent=1 // pred_check
      _
    $region19: #{tpu_custom_call.1} parent=1 // pred_check_branch
      %64 = sbr.rel (0) target = $region21
    $region20: #{tpu_custom_call.1} parent=1 // pred_region
      %s66 = ssub.s32 1024, 1024
      %67 = vsyncadd [#allocation9], %s66
      %s68 = sshll.u32 [#allocation10], 4
      %s69 = int_to_ptr.vmem [resolvable:$true] %s68
      %74 = dma.hbm_to_vmem [thread:$0]  %s4, 1024, %s69, [#allocation9], 64, 64, 4
    $region21: #{tpu_custom_call.1} parent=1 // pred_fallthru
      _
    // Predicated region
    $region22: #{tpu_custom_call.1} parent=1 // pred_check
      _
    $region23: #{tpu_custom_call.1} parent=1 // pred_check_branch
      %76 = sbr.rel (0) target = $region25
    $region24: #{tpu_custom_call.1} parent=1 // pred_region
      %s78 = ssub.s32 1024, 1024
      %79 = vsyncadd [#allocation12], %s78
      %s80 = sshll.u32 [#allocation11], 4
      %s81 = int_to_ptr.vmem [resolvable:$true] %s80
      %86 = dma.hbm_to_vmem [thread:$0]  %s5, 1024, %s81, [#allocation12], 64, 64, 4
    $region25: #{tpu_custom_call.1} parent=1 // pred_fallthru
      _
    // Predicated region
    $region26: #{tpu_custom_call.1} parent=1 // pred_check
      _
    $region27: #{tpu_custom_call.1} parent=1 // pred_check_branch
      %88 = sbr.rel (0) target = $region29
    $region28: #{tpu_custom_call.1} parent=1 // pred_region
      %s90 = ssub.s32 1024, 1024
      %91 = vsyncadd [#allocation12], %s90
      %s92 = sshll.u32 [#allocation13], 4
      %s93 = int_to_ptr.vmem [resolvable:$true] %s92
      %98 = dma.hbm_to_vmem [thread:$0]  %s6, 1024, %s93, [#allocation12], 64, 64, 4
    $region29: #{tpu_custom_call.1} parent=1 // pred_fallthru
      _
    // Predicated region
    $region30: #{tpu_custom_call.1} parent=1 // pred_check
      _
    $region31: #{tpu_custom_call.1} parent=1 // pred_check_branch
      %100 = sbr.rel (0) target = $region33
    $region32: #{tpu_custom_call.1} parent=1 // pred_region
      %s102 = ssub.s32 1024, 1024
      %103 = vsyncadd [#allocation15], %s102
      %s104 = sshll.u32 [#allocation14], 4
      %s105 = int_to_ptr.vmem [resolvable:$true] %s104
      %110 = dma.hbm_to_vmem [thread:$0]  %s7, 1024, %s105, [#allocation15], 64, 64, 4
    $region33: #{tpu_custom_call.1} parent=1 // pred_fallthru
      _
    // Predicated region
    $region34: #{tpu_custom_call.1} parent=1 // pred_check
      _
    $region35: #{tpu_custom_call.1} parent=1 // pred_check_branch
      %112 = sbr.rel (0) target = $region37
    $region36: #{tpu_custom_call.1} parent=1 // pred_region
      %113 = dma.done [#allocation3], 64
    $region37: #{tpu_custom_call.1} parent=1 // pred_fallthru
      _
    // Predicated region
    $region38: #{tpu_custom_call.1} parent=1 // pred_check
      _
    $region39: #{tpu_custom_call.1} parent=1 // pred_check_branch
      %115 = sbr.rel (0) target = $region41
    $region40: #{tpu_custom_call.1} parent=1 // pred_region
      %116 = dma.done [#allocation6], 128
    $region41: #{tpu_custom_call.1} parent=1 // pred_fallthru
      _
    // Predicated region
    $region42: #{tpu_custom_call.1} parent=1 // pred_check
      _
    $region43: #{tpu_custom_call.1} parent=1 // pred_check_branch
      %118 = sbr.rel (0) target = $region45
    $region44: #{tpu_custom_call.1} parent=1 // pred_region
      %119 = dma.done [#allocation6], 1024
    $region45: #{tpu_custom_call.1} parent=1 // pred_fallthru
      _
    // Predicated region
    $region46: #{tpu_custom_call.1} parent=1 // pred_check
      _
    $region47: #{tpu_custom_call.1} parent=1 // pred_check_branch
      %121 = sbr.rel (0) target = $region49
    $region48: #{tpu_custom_call.1} parent=1 // pred_region
      %122 = dma.done [#allocation9], 1024
    $region49: #{tpu_custom_call.1} parent=1 // pred_fallthru
      _
    // Predicated region
    $region50: #{tpu_custom_call.1} parent=1 // pred_check
      _
    $region51: #{tpu_custom_call.1} parent=1 // pred_check_branch
      %124 = sbr.rel (0) target = $region53
    $region52: #{tpu_custom_call.1} parent=1 // pred_region
      %125 = dma.done [#allocation9], 1024
    $region53: #{tpu_custom_call.1} parent=1 // pred_fallthru
      _
    // Predicated region
    $region54: #{tpu_custom_call.1} parent=1 // pred_check
      _
    $region55: #{tpu_custom_call.1} parent=1 // pred_check_branch
      %127 = sbr.rel (0) target = $region57
    $region56: #{tpu_custom_call.1} parent=1 // pred_region
      %128 = dma.done [#allocation12], 1024
    $region57: #{tpu_custom_call.1} parent=1 // pred_fallthru
      _
    // Predicated region
    $region58: #{tpu_custom_call.1} parent=1 // pred_check
      _
    $region59: #{tpu_custom_call.1} parent=1 // pred_check_branch
      %130 = sbr.rel (0) target = $region61
    $region60: #{tpu_custom_call.1} parent=1 // pred_region
      %131 = dma.done [#allocation12], 1024
    $region61: #{tpu_custom_call.1} parent=1 // pred_fallthru
      _
    // Predicated region
    $region62: #{tpu_custom_call.1} parent=1 // pred_check
      _
    $region63: #{tpu_custom_call.1} parent=1 // pred_check_branch
      %133 = sbr.rel (0) target = $region65
    $region64: #{tpu_custom_call.1} parent=1 // pred_region
      %134 = dma.done [#allocation15], 1024
    $region65: #{tpu_custom_call.1} parent=1 // pred_fallthru
      _
    %s136 = smul.u32 0, 128
    %v137 = vld [vmem:[#allocation2] sm:$0xf]
    %v138 = vld [vmem:[#allocation5] sm:$0xff]
    %v139 = vpack.c.bf16 %v138, %v138
    %v140 = vld [vmem:[#allocation7] sm:$0xf]
    %v141 = vld [vmem:[#allocation7 + $0x4] sm:$0xf]
    %v142 = vld [vmem:[#allocation7 + $0x8] sm:$0xf]
    %v143 = vld [vmem:[#allocation7 + $0xc] sm:$0xf]
    %v144 = vld [vmem:[#allocation7 + $0x10] sm:$0xf]
    %v145 = vld [vmem:[#allocation7 + $0x14] sm:$0xf]
    %v146 = vld [vmem:[#allocation7 + $0x18] sm:$0xf]
    %v147 = vld [vmem:[#allocation7 + $0x1c] sm:$0xf]
    %v148 = vld [vmem:[#allocation7 + $0x20] sm:$0xf]
    %v149 = vld [vmem:[#allocation7 + $0x24] sm:$0xf]
    %v150 = vld [vmem:[#allocation7 + $0x28] sm:$0xf]
    %v151 = vld [vmem:[#allocation7 + $0x2c] sm:$0xf]
    %v152 = vld [vmem:[#allocation7 + $0x30] sm:$0xf]
    %v153 = vld [vmem:[#allocation7 + $0x34] sm:$0xf]
    %v154 = vld [vmem:[#allocation7 + $0x38] sm:$0xf]
    %v155 = vld [vmem:[#allocation7 + $0x3c] sm:$0xf]
    %v172 = vunpack.c.l.b16 %v140
    %v173 = vunpack.c.l.b16 %v141
    %v174 = vunpack.c.l.b16 %v142
    %v175 = vunpack.c.l.b16 %v143
    %v176 = vunpack.c.l.b16 %v144
    %v177 = vunpack.c.l.b16 %v145
    %v178 = vunpack.c.l.b16 %v146
    %v179 = vunpack.c.l.b16 %v147
    %v180 = vunpack.c.l.b16 %v148
    %v181 = vunpack.c.l.b16 %v149
    %v182 = vunpack.c.l.b16 %v150
    %v183 = vunpack.c.l.b16 %v151
    %v184 = vunpack.c.l.b16 %v152
    %v185 = vunpack.c.l.b16 %v153
    %v186 = vunpack.c.l.b16 %v154
    %v187 = vunpack.c.l.b16 %v155
    %v188 = vpack.c.b16 %v173, %v172
    %v189 = vpack.c.b16 %v175, %v174
    %v190 = vpack.c.b16 %v177, %v176
    %v191 = vpack.c.b16 %v179, %v178
    %v192 = vpack.c.b16 %v181, %v180
    %v193 = vpack.c.b16 %v183, %v182
    %v194 = vpack.c.b16 %v185, %v184
    %v195 = vpack.c.b16 %v187, %v186
    %204 = vmatprep.subr.bf16.mxu0 0
    %205 = vmatpush1.bf16.msra.mxu0 %v188
    %206 = vmatprep.subr.bf16.mxu0 0
    %207 = vmatpush1.bf16.msra.mxu0 %v189
    %208 = vmatprep.subr.bf16.mxu0 0
    %209 = vmatpush1.bf16.msra.mxu0 %v190
    %210 = vmatprep.subr.bf16.mxu0 0
    %211 = vmatpush1.bf16.msra.mxu0 %v191
    %212 = vmatprep.subr.bf16.mxu0 0
    %213 = vmatpush1.bf16.msra.mxu0 %v192
    %214 = vmatprep.subr.bf16.mxu0 0
    %215 = vmatpush1.bf16.msra.mxu0 %v193
    %216 = vmatprep.subr.bf16.mxu0 0
    %217 = vmatpush1.bf16.msra.mxu0 %v194
    %218 = vmatprep.subr.bf16.mxu0 0
    %219 = vmatpush1.bf16.msra.mxu0 %v195
    %220 = vmatprep.subr.bf16.mxu0 0
    %221 = vmatpush1.bf16.msra.mxu0 0
    %222 = vmatprep.subr.bf16.mxu0 0
    %223 = vmatpush1.bf16.msra.mxu0 0
    %224 = vmatprep.subr.bf16.mxu0 0
    %225 = vmatpush1.bf16.msra.mxu0 0
    %226 = vmatprep.subr.bf16.mxu0 0
    %227 = vmatpush1.bf16.msra.mxu0 0
    %228 = vmatprep.subr.bf16.mxu0 0
    %229 = vmatpush1.bf16.msra.mxu0 0
    %230 = vmatprep.subr.bf16.mxu0 0
    %231 = vmatpush1.bf16.msra.mxu0 0
    %232 = vmatprep.subr.bf16.mxu0 0
    %233 = vmatpush1.bf16.msra.mxu0 0
    %234 = vmatprep.subr.bf16.mxu0 0
    %235 = vmatpush1.bf16.msra.mxu0 0
    %236 = vmatprep.mubr.bf16.mxu0 0
    %237 = vmatmul.mubr.bf16.gmra.mrb[0].mxu0 %v137
    %v238 = vpop.f32.mrb[0].mxu0
    %v239 = vadd.f32 0.0, %v238
    %v240 = vpop.f32.mrb[0].mxu0
    %v241 = vpop.f32.mrb[0].mxu0
    %v242 = vpop.f32.mrb[0].mxu0
    %243 = vdwg.mxu0
    %v244 = vld [vmem:[#allocation8] sm:$0xf]
    %v245 = vld [vmem:[#allocation8 + $0x4] sm:$0xf]
    %v246 = vld [vmem:[#allocation8 + $0x8] sm:$0xf]
    %v247 = vld [vmem:[#allocation8 + $0xc] sm:$0xf]
    %v248 = vld [vmem:[#allocation8 + $0x10] sm:$0xf]
    %v249 = vld [vmem:[#allocation8 + $0x14] sm:$0xf]
    %v250 = vld [vmem:[#allocation8 + $0x18] sm:$0xf]
    %v251 = vld [vmem:[#allocation8 + $0x1c] sm:$0xf]
    %v252 = vld [vmem:[#allocation8 + $0x20] sm:$0xf]
    %v253 = vld [vmem:[#allocation8 + $0x24] sm:$0xf]
    %v254 = vld [vmem:[#allocation8 + $0x28] sm:$0xf]
    %v255 = vld [vmem:[#allocation8 + $0x2c] sm:$0xf]
    %v256 = vld [vmem:[#allocation8 + $0x30] sm:$0xf]
    %v257 = vld [vmem:[#allocation8 + $0x34] sm:$0xf]
    %v258 = vld [vmem:[#allocation8 + $0x38] sm:$0xf]
    %v259 = vld [vmem:[#allocation8 + $0x3c] sm:$0xf]
    %v276 = vunpack.c.l.b16 %v244
    %v277 = vunpack.c.l.b16 %v245
    %v278 = vunpack.c.l.b16 %v246
    %v279 = vunpack.c.l.b16 %v247
    %v280 = vunpack.c.l.b16 %v248
    %v281 = vunpack.c.l.b16 %v249
    %v282 = vunpack.c.l.b16 %v250
    %v283 = vunpack.c.l.b16 %v251
    %v284 = vunpack.c.l.b16 %v252
    %v285 = vunpack.c.l.b16 %v253
    %v286 = vunpack.c.l.b16 %v254
    %v287 = vunpack.c.l.b16 %v255
    %v288 = vunpack.c.l.b16 %v256
    %v289 = vunpack.c.l.b16 %v257
    %v290 = vunpack.c.l.b16 %v258
    %v291 = vunpack.c.l.b16 %v259
    %v292 = vpack.c.b16 %v277, %v276
    %v293 = vpack.c.b16 %v279, %v278
    %v294 = vpack.c.b16 %v281, %v280
    %v295 = vpack.c.b16 %v283, %v282
    %v296 = vpack.c.b16 %v285, %v284
    %v297 = vpack.c.b16 %v287, %v286
    %v298 = vpack.c.b16 %v289, %v288
    %v299 = vpack.c.b16 %v291, %v290
    %308 = vmatprep.subr.bf16.mxu0 0
    %309 = vmatpush1.bf16.msra.mxu0 %v292
    %310 = vmatprep.subr.bf16.mxu0 0
    %311 = vmatpush1.bf16.msra.mxu0 %v293
    %312 = vmatprep.subr.bf16.mxu0 0
    %313 = vmatpush1.bf16.msra.mxu0 %v294
    %314 = vmatprep.subr.bf16.mxu0 0
    %315 = vmatpush1.bf16.msra.mxu0 %v295
    %316 = vmatprep.subr.bf16.mxu0 0
    %317 = vmatpush1.bf16.msra.mxu0 %v296
    %318 = vmatprep.subr.bf16.mxu0 0
    %319 = vmatpush1.bf16.msra.mxu0 %v297
    %320 = vmatprep.subr.bf16.mxu0 0
    %321 = vmatpush1.bf16.msra.mxu0 %v298
    %322 = vmatprep.subr.bf16.mxu0 0
    %323 = vmatpush1.bf16.msra.mxu0 %v299
    %324 = vmatprep.subr.bf16.mxu0 0
    %325 = vmatpush1.bf16.msra.mxu0 0
    %326 = vmatprep.subr.bf16.mxu0 0
    %327 = vmatpush1.bf16.msra.mxu0 0
    %328 = vmatprep.subr.bf16.mxu0 0
    %329 = vmatpush1.bf16.msra.mxu0 0
    %330 = vmatprep.subr.bf16.mxu0 0
    %331 = vmatpush1.bf16.msra.mxu0 0
    %332 = vmatprep.subr.bf16.mxu0 0
    %333 = vmatpush1.bf16.msra.mxu0 0
    %334 = vmatprep.subr.bf16.mxu0 0
    %335 = vmatpush1.bf16.msra.mxu0 0
    %336 = vmatprep.subr.bf16.mxu0 0
    %337 = vmatpush1.bf16.msra.mxu0 0
    %338 = vmatprep.subr.bf16.mxu0 0
    %339 = vmatpush1.bf16.msra.mxu0 0
    %340 = vmatprep.mubr.bf16.mxu0 0
    %341 = vmatmul.mubr.bf16.gmra.mrb[0].mxu0 %v137
    %v342 = vpop.f32.mrb[0].mxu0
    %v343 = vadd.f32 0.0, %v342
    %v344 = vpop.f32.mrb[0].mxu0
    %v345 = vpop.f32.mrb[0].mxu0
    %v346 = vpop.f32.mrb[0].mxu0
    %347 = vdwg.mxu0
    %v348 = vld [vmem:[#allocation10] sm:$0xf]
    %v349 = vld [vmem:[#allocation10 + $0x4] sm:$0xf]
    %v350 = vld [vmem:[#allocation10 + $0x8] sm:$0xf]
    %v351 = vld [vmem:[#allocation10 + $0xc] sm:$0xf]
    %v352 = vld [vmem:[#allocation10 + $0x10] sm:$0xf]
    %v353 = vld [vmem:[#allocation10 + $0x14] sm:$0xf]
    %v354 = vld [vmem:[#allocation10 + $0x18] sm:$0xf]
    %v355 = vld [vmem:[#allocation10 + $0x1c] sm:$0xf]
    %v356 = vld [vmem:[#allocation10 + $0x20] sm:$0xf]
    %v357 = vld [vmem:[#allocation10 + $0x24] sm:$0xf]
    %v358 = vld [vmem:[#allocation10 + $0x28] sm:$0xf]
    %v359 = vld [vmem:[#allocation10 + $0x2c] sm:$0xf]
    %v360 = vld [vmem:[#allocation10 + $0x30] sm:$0xf]
    %v361 = vld [vmem:[#allocation10 + $0x34] sm:$0xf]
    %v362 = vld [vmem:[#allocation10 + $0x38] sm:$0xf]
    %v363 = vld [vmem:[#allocation10 + $0x3c] sm:$0xf]
    %v380 = vunpack.c.l.b16 %v348
    %v381 = vunpack.c.l.b16 %v349
    %v382 = vunpack.c.l.b16 %v350
    %v383 = vunpack.c.l.b16 %v351
    %v384 = vunpack.c.l.b16 %v352
    %v385 = vunpack.c.l.b16 %v353
    %v386 = vunpack.c.l.b16 %v354
    %v387 = vunpack.c.l.b16 %v355
    %v388 = vunpack.c.l.b16 %v356
    %v389 = vunpack.c.l.b16 %v357
    %v390 = vunpack.c.l.b16 %v358
    %v391 = vunpack.c.l.b16 %v359
    %v392 = vunpack.c.l.b16 %v360
    %v393 = vunpack.c.l.b16 %v361
    %v394 = vunpack.c.l.b16 %v362
    %v395 = vunpack.c.l.b16 %v363
    %v396 = vpack.c.b16 %v381, %v380
    %v397 = vpack.c.b16 %v383, %v382
    %v398 = vpack.c.b16 %v385, %v384
    %v399 = vpack.c.b16 %v387, %v386
    %v400 = vpack.c.b16 %v389, %v388
    %v401 = vpack.c.b16 %v391, %v390
    %v402 = vpack.c.b16 %v393, %v392
    %v403 = vpack.c.b16 %v395, %v394
    %412 = vmatprep.subr.bf16.mxu0 0
    %413 = vmatpush1.bf16.msra.mxu0 %v396
    %414 = vmatprep.subr.bf16.mxu0 0
    %415 = vmatpush1.bf16.msra.mxu0 %v397
    %416 = vmatprep.subr.bf16.mxu0 0
    %417 = vmatpush1.bf16.msra.mxu0 %v398
    %418 = vmatprep.subr.bf16.mxu0 0
    %419 = vmatpush1.bf16.msra.mxu0 %v399
    %420 = vmatprep.subr.bf16.mxu0 0
    %421 = vmatpush1.bf16.msra.mxu0 %v400
    %422 = vmatprep.subr.bf16.mxu0 0
    %423 = vmatpush1.bf16.msra.mxu0 %v401
    %424 = vmatprep.subr.bf16.mxu0 0
    %425 = vmatpush1.bf16.msra.mxu0 %v402
    %426 = vmatprep.subr.bf16.mxu0 0
    %427 = vmatpush1.bf16.msra.mxu0 %v403
    %428 = vmatprep.subr.bf16.mxu0 0
    %429 = vmatpush1.bf16.msra.mxu0 0
    %430 = vmatprep.subr.bf16.mxu0 0
    %431 = vmatpush1.bf16.msra.mxu0 0
    %432 = vmatprep.subr.bf16.mxu0 0
    %433 = vmatpush1.bf16.msra.mxu0 0
    %434 = vmatprep.subr.bf16.mxu0 0
    %435 = vmatpush1.bf16.msra.mxu0 0
    %436 = vmatprep.subr.bf16.mxu0 0
    %437 = vmatpush1.bf16.msra.mxu0 0
    %438 = vmatprep.subr.bf16.mxu0 0
    %439 = vmatpush1.bf16.msra.mxu0 0
    %440 = vmatprep.subr.bf16.mxu0 0
    %441 = vmatpush1.bf16.msra.mxu0 0
    %442 = vmatprep.subr.bf16.mxu0 0
    %443 = vmatpush1.bf16.msra.mxu0 0
    %444 = vmatprep.mubr.bf16.mxu0 0
    %445 = vmatmul.mubr.bf16.gmra.mrb[0].mxu0 %v137
    %v446 = vpop.f32.mrb[0].mxu0
    %v447 = vadd.f32 0.0, %v446
    %v448 = vpop.f32.mrb[0].mxu0
    %v449 = vpop.f32.mrb[0].mxu0
    %v450 = vpop.f32.mrb[0].mxu0
    %451 = vdwg.mxu0
    %v452 = vld [vmem:[#allocation11] sm:$0xf]
    %v453 = vld [vmem:[#allocation11 + $0x4] sm:$0xf]
    %v454 = vld [vmem:[#allocation11 + $0x8] sm:$0xf]
    %v455 = vld [vmem:[#allocation11 + $0xc] sm:$0xf]
    %v456 = vld [vmem:[#allocation11 + $0x10] sm:$0xf]
    %v457 = vld [vmem:[#allocation11 + $0x14] sm:$0xf]
    %v458 = vld [vmem:[#allocation11 + $0x18] sm:$0xf]
    %v459 = vld [vmem:[#allocation11 + $0x1c] sm:$0xf]
    %v460 = vld [vmem:[#allocation11 + $0x20] sm:$0xf]
    %v461 = vld [vmem:[#allocation11 + $0x24] sm:$0xf]
    %v462 = vld [vmem:[#allocation11 + $0x28] sm:$0xf]
    %v463 = vld [vmem:[#allocation11 + $0x2c] sm:$0xf]
    %v464 = vld [vmem:[#allocation11 + $0x30] sm:$0xf]
    %v465 = vld [vmem:[#allocation11 + $0x34] sm:$0xf]
    %v466 = vld [vmem:[#allocation11 + $0x38] sm:$0xf]
    %v467 = vld [vmem:[#allocation11 + $0x3c] sm:$0xf]
    %v484 = vunpack.c.l.b16 %v452
    %v485 = vunpack.c.l.b16 %v453
    %v486 = vunpack.c.l.b16 %v454
    %v487 = vunpack.c.l.b16 %v455
    %v488 = vunpack.c.l.b16 %v456
    %v489 = vunpack.c.l.b16 %v457
    %v490 = vunpack.c.l.b16 %v458
    %v491 = vunpack.c.l.b16 %v459
    %v492 = vunpack.c.l.b16 %v460
    %v493 = vunpack.c.l.b16 %v461
    %v494 = vunpack.c.l.b16 %v462
    %v495 = vunpack.c.l.b16 %v463
    %v496 = vunpack.c.l.b16 %v464
    %v497 = vunpack.c.l.b16 %v465
    %v498 = vunpack.c.l.b16 %v466
    %v499 = vunpack.c.l.b16 %v467
    %v500 = vpack.c.b16 %v485, %v484
    %v501 = vpack.c.b16 %v487, %v486
    %v502 = vpack.c.b16 %v489, %v488
    %v503 = vpack.c.b16 %v491, %v490
    %v504 = vpack.c.b16 %v493, %v492
    %v505 = vpack.c.b16 %v495, %v494
    %v506 = vpack.c.b16 %v497, %v496
    %v507 = vpack.c.b16 %v499, %v498
    %516 = vmatprep.subr.bf16.mxu0 0
    %517 = vmatpush1.bf16.msra.mxu0 %v500
    %518 = vmatprep.subr.bf16.mxu0 0
    %519 = vmatpush1.bf16.msra.mxu0 %v501
    %520 = vmatprep.subr.bf16.mxu0 0
    %521 = vmatpush1.bf16.msra.mxu0 %v502
    %522 = vmatprep.subr.bf16.mxu0 0
    %523 = vmatpush1.bf16.msra.mxu0 %v503
    %524 = vmatprep.subr.bf16.mxu0 0
    %525 = vmatpush1.bf16.msra.mxu0 %v504
    %526 = vmatprep.subr.bf16.mxu0 0
    %527 = vmatpush1.bf16.msra.mxu0 %v505
    %528 = vmatprep.subr.bf16.mxu0 0
    %529 = vmatpush1.bf16.msra.mxu0 %v506
    %530 = vmatprep.subr.bf16.mxu0 0
    %531 = vmatpush1.bf16.msra.mxu0 %v507
    %532 = vmatprep.subr.bf16.mxu0 0
    %533 = vmatpush1.bf16.msra.mxu0 0
    %534 = vmatprep.subr.bf16.mxu0 0
    %535 = vmatpush1.bf16.msra.mxu0 0
    %536 = vmatprep.subr.bf16.mxu0 0
    %537 = vmatpush1.bf16.msra.mxu0 0
    %538 = vmatprep.subr.bf16.mxu0 0
    %539 = vmatpush1.bf16.msra.mxu0 0
    %540 = vmatprep.subr.bf16.mxu0 0
    %541 = vmatpush1.bf16.msra.mxu0 0
    %542 = vmatprep.subr.bf16.mxu0 0
    %543 = vmatpush1.bf16.msra.mxu0 0
    %544 = vmatprep.subr.bf16.mxu0 0
    %545 = vmatpush1.bf16.msra.mxu0 0
    %546 = vmatprep.subr.bf16.mxu0 0
    %547 = vmatpush1.bf16.msra.mxu0 0
    %548 = vmatprep.mubr.bf16.mxu0 0
    %549 = vmatmul.mubr.bf16.gmra.mrb[0].mxu0 %v139
    %v550 = vpop.f32.mrb[0].mxu0
    %v551 = vadd.f32 0.0, %v550
    %v552 = vpop.f32.mrb[0].mxu0
    %v553 = vpop.f32.mrb[0].mxu0
    %v554 = vpop.f32.mrb[0].mxu0
    %555 = vdwg.mxu0
    %v556 = vld [vmem:[#allocation13] sm:$0xf]
    %v557 = vld [vmem:[#allocation13 + $0x4] sm:$0xf]
    %v558 = vld [vmem:[#allocation13 + $0x8] sm:$0xf]
    %v559 = vld [vmem:[#allocation13 + $0xc] sm:$0xf]
    %v560 = vld [vmem:[#allocation13 + $0x10] sm:$0xf]
    %v561 = vld [vmem:[#allocation13 + $0x14] sm:$0xf]
    %v562 = vld [vmem:[#allocation13 + $0x18] sm:$0xf]
    %v563 = vld [vmem:[#allocation13 + $0x1c] sm:$0xf]
    %v564 = vld [vmem:[#allocation13 + $0x20] sm:$0xf]
    %v565 = vld [vmem:[#allocation13 + $0x24] sm:$0xf]
    %v566 = vld [vmem:[#allocation13 + $0x28] sm:$0xf]
    %v567 = vld [vmem:[#allocation13 + $0x2c] sm:$0xf]
    %v568 = vld [vmem:[#allocation13 + $0x30] sm:$0xf]
    %v569 = vld [vmem:[#allocation13 + $0x34] sm:$0xf]
    %v570 = vld [vmem:[#allocation13 + $0x38] sm:$0xf]
    %v571 = vld [vmem:[#allocation13 + $0x3c] sm:$0xf]
    %v588 = vunpack.c.l.b16 %v556
    %v589 = vunpack.c.l.b16 %v557
    %v590 = vunpack.c.l.b16 %v558
    %v591 = vunpack.c.l.b16 %v559
    %v592 = vunpack.c.l.b16 %v560
    %v593 = vunpack.c.l.b16 %v561
    %v594 = vunpack.c.l.b16 %v562
    %v595 = vunpack.c.l.b16 %v563
    %v596 = vunpack.c.l.b16 %v564
    %v597 = vunpack.c.l.b16 %v565
    %v598 = vunpack.c.l.b16 %v566
    %v599 = vunpack.c.l.b16 %v567
    %v600 = vunpack.c.l.b16 %v568
    %v601 = vunpack.c.l.b16 %v569
    %v602 = vunpack.c.l.b16 %v570
    %v603 = vunpack.c.l.b16 %v571
    %v604 = vpack.c.b16 %v589, %v588
    %v605 = vpack.c.b16 %v591, %v590
    %v606 = vpack.c.b16 %v593, %v592
    %v607 = vpack.c.b16 %v595, %v594
    %v608 = vpack.c.b16 %v597, %v596
    %v609 = vpack.c.b16 %v599, %v598
    %v610 = vpack.c.b16 %v601, %v600
    %v611 = vpack.c.b16 %v603, %v602
    %620 = vmatprep.subr.bf16.mxu0 0
    %621 = vmatpush1.bf16.msra.mxu0 %v604
    %622 = vmatprep.subr.bf16.mxu0 0
    %623 = vmatpush1.bf16.msra.mxu0 %v605
    %624 = vmatprep.subr.bf16.mxu0 0
    %625 = vmatpush1.bf16.msra.mxu0 %v606
    %626 = vmatprep.subr.bf16.mxu0 0
    %627 = vmatpush1.bf16.msra.mxu0 %v607
    %628 = vmatprep.subr.bf16.mxu0 0
    %629 = vmatpush1.bf16.msra.mxu0 %v608
    %630 = vmatprep.subr.bf16.mxu0 0
    %631 = vmatpush1.bf16.msra.mxu0 %v609
    %632 = vmatprep.subr.bf16.mxu0 0
    %633 = vmatpush1.bf16.msra.mxu0 %v610
    %634 = vmatprep.subr.bf16.mxu0 0
    %635 = vmatpush1.bf16.msra.mxu0 %v611
    %636 = vmatprep.subr.bf16.mxu0 0
    %637 = vmatpush1.bf16.msra.mxu0 0
    %638 = vmatprep.subr.bf16.mxu0 0
    %639 = vmatpush1.bf16.msra.mxu0 0
    %640 = vmatprep.subr.bf16.mxu0 0
    %641 = vmatpush1.bf16.msra.mxu0 0
    %642 = vmatprep.subr.bf16.mxu0 0
    %643 = vmatpush1.bf16.msra.mxu0 0
    %644 = vmatprep.subr.bf16.mxu0 0
    %645 = vmatpush1.bf16.msra.mxu0 0
    %646 = vmatprep.subr.bf16.mxu0 0
    %647 = vmatpush1.bf16.msra.mxu0 0
    %648 = vmatprep.subr.bf16.mxu0 0
    %649 = vmatpush1.bf16.msra.mxu0 0
    %650 = vmatprep.subr.bf16.mxu0 0
    %651 = vmatpush1.bf16.msra.mxu0 0
    %652 = vmatprep.mubr.bf16.mxu0 0
    %653 = vmatmul.mubr.bf16.gmra.mrb[0].mxu0 %v139
    %v654 = vpop.f32.mrb[0].mxu0
    %v655 = vadd.f32 0.0, %v654
    %v656 = vpop.f32.mrb[0].mxu0
    %v657 = vpop.f32.mrb[0].mxu0
    %v658 = vpop.f32.mrb[0].mxu0
    %659 = vdwg.mxu0
    %v660 = vld [vmem:[#allocation14] sm:$0xf]
    %v661 = vld [vmem:[#allocation14 + $0x4] sm:$0xf]
    %v662 = vld [vmem:[#allocation14 + $0x8] sm:$0xf]
    %v663 = vld [vmem:[#allocation14 + $0xc] sm:$0xf]
    %v664 = vld [vmem:[#allocation14 + $0x10] sm:$0xf]
    %v665 = vld [vmem:[#allocation14 + $0x14] sm:$0xf]
    %v666 = vld [vmem:[#allocation14 + $0x18] sm:$0xf]
    %v667 = vld [vmem:[#allocation14 + $0x1c] sm:$0xf]
    %v668 = vld [vmem:[#allocation14 + $0x20] sm:$0xf]
    %v669 = vld [vmem:[#allocation14 + $0x24] sm:$0xf]
    %v670 = vld [vmem:[#allocation14 + $0x28] sm:$0xf]
    %v671 = vld [vmem:[#allocation14 + $0x2c] sm:$0xf]
    %v672 = vld [vmem:[#allocation14 + $0x30] sm:$0xf]
    %v673 = vld [vmem:[#allocation14 + $0x34] sm:$0xf]
    %v674 = vld [vmem:[#allocation14 + $0x38] sm:$0xf]
    %v675 = vld [vmem:[#allocation14 + $0x3c] sm:$0xf]
    %v692 = vunpack.c.l.b16 %v660
    %v693 = vunpack.c.l.b16 %v661
    %v694 = vunpack.c.l.b16 %v662
    %v695 = vunpack.c.l.b16 %v663
    %v696 = vunpack.c.l.b16 %v664
    %v697 = vunpack.c.l.b16 %v665
    %v698 = vunpack.c.l.b16 %v666
    %v699 = vunpack.c.l.b16 %v667
    %v700 = vunpack.c.l.b16 %v668
    %v701 = vunpack.c.l.b16 %v669
    %v702 = vunpack.c.l.b16 %v670
    %v703 = vunpack.c.l.b16 %v671
    %v704 = vunpack.c.l.b16 %v672
    %v705 = vunpack.c.l.b16 %v673
    %v706 = vunpack.c.l.b16 %v674
    %v707 = vunpack.c.l.b16 %v675
    %v708 = vpack.c.b16 %v693, %v692
    %v709 = vpack.c.b16 %v695, %v694
    %v710 = vpack.c.b16 %v697, %v696
    %v711 = vpack.c.b16 %v699, %v698
    %v712 = vpack.c.b16 %v701, %v700
    %v713 = vpack.c.b16 %v703, %v702
    %v714 = vpack.c.b16 %v705, %v704
    %v715 = vpack.c.b16 %v707, %v706
    %724 = vmatprep.subr.bf16.mxu0 0
    %725 = vmatpush1.bf16.msra.mxu0 %v708
    %726 = vmatprep.subr.bf16.mxu0 0
    %727 = vmatpush1.bf16.msra.mxu0 %v709
    %728 = vmatprep.subr.bf16.mxu0 0
    %729 = vmatpush1.bf16.msra.mxu0 %v710
    %730 = vmatprep.subr.bf16.mxu0 0
    %731 = vmatpush1.bf16.msra.mxu0 %v711
    %732 = vmatprep.subr.bf16.mxu0 0
    %733 = vmatpush1.bf16.msra.mxu0 %v712
    %734 = vmatprep.subr.bf16.mxu0 0
    %735 = vmatpush1.bf16.msra.mxu0 %v713
    %736 = vmatprep.subr.bf16.mxu0 0
    %737 = vmatpush1.bf16.msra.mxu0 %v714
    %738 = vmatprep.subr.bf16.mxu0 0
    %739 = vmatpush1.bf16.msra.mxu0 %v715
    %740 = vmatprep.subr.bf16.mxu0 0
    %741 = vmatpush1.bf16.msra.mxu0 0
    %742 = vmatprep.subr.bf16.mxu0 0
    %743 = vmatpush1.bf16.msra.mxu0 0
    %744 = vmatprep.subr.bf16.mxu0 0
    %745 = vmatpush1.bf16.msra.mxu0 0
    %746 = vmatprep.subr.bf16.mxu0 0
    %747 = vmatpush1.bf16.msra.mxu0 0
    %748 = vmatprep.subr.bf16.mxu0 0
    %749 = vmatpush1.bf16.msra.mxu0 0
    %750 = vmatprep.subr.bf16.mxu0 0
    %751 = vmatpush1.bf16.msra.mxu0 0
    %752 = vmatprep.subr.bf16.mxu0 0
    %753 = vmatpush1.bf16.msra.mxu0 0
    %754 = vmatprep.subr.bf16.mxu0 0
    %755 = vmatpush1.bf16.msra.mxu0 0
    %756 = vmatprep.mubr.bf16.mxu0 0
    %757 = vmatmul.mubr.bf16.gmra.mrb[0].mxu0 %v139
    %v758 = vpop.f32.mrb[0].mxu0
    %v759 = vadd.f32 0.0, %v758
    %v760 = vpop.f32.mrb[0].mxu0
    %v761 = vpop.f32.mrb[0].mxu0
    %v762 = vpop.f32.mrb[0].mxu0
    %763 = vdwg.mxu0
    %s764 = sshra.s32 %s136, 7
    %s765 = sand.u32 %s136, 127
    %s766 = scalar_lea.vmem [#allocation5], %s764
    %v767 = vld [vmem:[%s766] sm:$0xff]
    %v768 = vmul.f32 %v239, %v551
    %v769 = vmul.f32 %v768, 0.5
    %v770 = vtanh.pop %v769
    %v771 = vmul.f32 %v770, 0.5
    %v772 = vadd.f32 %v771, 0.5
    %v773 = vmul.f32 %v343, %v655
    %v774 = vmul.f32 %v773, 0.5
    %v775 = vtanh.pop %v774
    %v776 = vmul.f32 %v775, 0.5
    %v777 = vadd.f32 %v776, 0.5
    %v778 = vmul.f32 %v772, %v759
    %v779 = vmul.f32 %v447, %v778
    %vm780 = vcmp.gt.f32.partialorder %v779, 20.0
    %v781 = vmin.f32 %v779, 20.0
    %v782 = vmul.f32 %v781, 1.442695
    %v783 = vpow.pop %v782
    %v784 = vadd.f32 %v783, 1.0
    %v785 = vlog2.pop %v784
    %v786 = vmul.f32 %v785, 0.6931472
    %v787 = vmul.f32 -0.5, %v783
    %v788 = vadd.f32 %v787, 1.0
    %v789 = vmul.f32 %v788, %v783
    %v790 = vand.u32 2147483647, %v783
    %vm791 = vcmp.lt.f32.partialorder %v790, 0.0004427343
    %v792 = vsel %vm791, %v789, %v786
    %v793 = vsel %vm780, %v779, %v792
    %v794 = vsub.f32 1.0, %v777
    %v795 = vlog2.pop %v793
    %v796 = vmul.f32 %v795, 0.6931472
    %v797 = vmul.f32 %v794, %v796
    %v798 = vlog2.pop %v767
    %v799 = vmul.f32 %v798, 0.6931472
    %v800 = vmul.f32 %v777, %v799
    %v801 = vadd.f32 %v797, %v800
    %v802 = vmul.f32 %v801, 1.442695
    %v803 = vpow.pop %v802
    %804 = vst [vmem:[#allocation16] sm:$0xff] %v803
    // Predicated region
    $region66: #{tpu_custom_call.1} parent=1 // pred_check
      _
    $region67: #{tpu_custom_call.1} parent=1 // pred_check_branch
      %806 = sbr.rel (0) target = $region69
    $region68: #{tpu_custom_call.1} parent=1 // pred_region
      %s808 = ssub.s32 128, 128
      %809 = vsyncadd [#allocation4], %s808
      %s811 = sshll.u32 [#allocation16], 4
      %s812 = int_to_ptr.vmem [resolvable:$true] %s811
      %814 = dma.vmem_to_hbm [thread:$0]  %s812, 128, %s8, [#allocation4]
    $region69: #{tpu_custom_call.1} parent=1 // pred_fallthru
      _
    // Predicated region
    $region70: #{tpu_custom_call.1} parent=1 // pred_check
      _
    $region71: #{tpu_custom_call.1} parent=1 // pred_check_branch
      %816 = sbr.rel (0) target = $region73
    $region72: #{tpu_custom_call.1} parent=1 // pred_region
      %817 = dma.done [#allocation4], 128
    $region73: #{tpu_custom_call.1} parent=1 // pred_fallthru
      _
    %818 = vsyncpa [#allocation3], 1
    %819 = vsyncpa [#allocation6], 1
    %820 = vsyncpa [#allocation9], 1
    %821 = vsyncpa [#allocation12], 1
    %822 = vsyncpa [#allocation15], 1
    %823 = vsyncpa [#allocation4], 1

</llo_original>
